<compile_context>
chip_gen: v5e
topology: v5e:2x2
jax: 0.10.0
libtpu: 0.0.40
codegen_flags: <defaults>
</compile_context>

<pallas_src>
import jax
import jax.numpy as jnp
from jax.experimental import pallas as pl
from jax.experimental.pallas import tpu as pltpu

# ---- Module config (mirrors the PyTorch __init__ defaults) ------------------
HIDDEN_SIZE = 512
NUM_HEADS_ARG = 16
_num_heads = HIDDEN_SIZE // NUM_HEADS_ARG                 # 32
_hidden_per_head = HIDDEN_SIZE // _num_heads              # 16
INV_SCALE_FACTOR = (_hidden_per_head ** (-0.25)) ** 0.5   # 16 ** -0.125
DROPOUT_P = 0.0                                           # identity at p=0.0


def prepare_weights(key_w, value_w):
    """One-time weight preparation (outside the per-call path):
    - fold 1/inv_scale_factor into the key weight,
    - pre-transpose it so the kernel does a plain [M,K] x [K,N] MXU matmul,
    - cast both weights to bf16 (accumulation stays f32 on the MXU)."""
    key_t_scaled = (key_w.T / INV_SCALE_FACTOR).astype(jnp.bfloat16)  # [H, H]
    value_b = value_w.astype(jnp.bfloat16)                            # [H, H]
    return key_t_scaled, value_b


def _sdpa_like_kernel(x_ref, kt_ref, v_ref, o_ref):
    # logits = (x @ key^T) / inv_scale  -- transpose & scale already folded into kt_ref.
    # x_ref is already bf16 (cast once in the wrapper).
    logits = jnp.dot(x_ref[...], kt_ref[...], preferred_element_type=jnp.float32)
    # Numerically-stable softmax (f32). Normalization is applied AFTER the second
    # matmul so the EUP reciprocal overlaps the MXU instead of gating it.
    m = jnp.max(logits, axis=-1, keepdims=True)
    e = jnp.exp(logits - m)
    denom = jnp.sum(e, axis=-1, keepdims=True)
    # dropout(p=0.0) is identity; TODO(synk): nonzero dropout needs pltpu.prng_seed/prng_random_bits.
    acc = jnp.dot(e.astype(jnp.bfloat16), v_ref[...], preferred_element_type=jnp.float32)
    o_ref[...] = (acc * pl.reciprocal(denom, approx=True)).astype(o_ref.dtype)


def model_forward(x1, key_t_scaled_bf16, value_bf16, *, tm=1024, out_dtype=jnp.float32):
    """x1: [B, S, H] f32; key_t_scaled_bf16 / value_bf16: [H, H] bf16 (see prepare_weights).

    tm is capped at 1024: f32 softmax temporaries (~3*tm*H*4 B) plus double-buffered
    bf16 x / f32 out tiles stay well inside the default scoped VMEM even on v7x.
    out_dtype can be set to jnp.bfloat16 by consumers that tolerate it (halves writeback)."""
    B, S, H = x1.shape
    M = B * S
    # Cast activation to bf16 ONCE here (halves x HBM traffic & VMEM buffers).
    x2d = x1.reshape(M, H).astype(jnp.bfloat16)

    tm = min(tm, M)              # full-extent block when M is small (always legal)
    grid_m = pl.cdiv(M, tm)

    out_itemsize = jnp.dtype(out_dtype).itemsize
    cost = pl.CostEstimate(
        flops=4 * M * H * H,                              # two [M,H]x[H,H] matmuls
        transcendentals=M * H,                            # exp in the softmax
        bytes_accessed=M * H * 2                          # bf16 activation in
        + 2 * H * H * 2                                   # bf16 weights
        + M * H * out_itemsize,                           # output
    )

    out2d = pl.pallas_call(
        _sdpa_like_kernel,
        out_shape=jax.ShapeDtypeStruct((M, H), out_dtype),
        grid_spec=pltpu.PrefetchScalarGridSpec(
            num_scalar_prefetch=0,
            grid=(grid_m,),
            in_specs=[
                # activation rows, tiled over M
                pl.BlockSpec((tm, H), lambda i: (i, 0)),
                # key^T (scaled) and value: grid-invariant -> fetched once; single-buffered
                # (no point double-buffering a constant block; saves ~1 MiB VMEM).
                pl.BlockSpec((H, H), lambda i: (0, 0), pipeline_mode=pl.Buffered(1)),
                pl.BlockSpec((H, H), lambda i: (0, 0), pipeline_mode=pl.Buffered(1)),
            ],
            out_specs=pl.BlockSpec((tm, H), lambda i: (i, 0)),
        ),
        compiler_params=pltpu.CompilerParams(
            # Row tiles are independent -> megacore sharding on v7x when grid_m >= 2.
            dimension_semantics=("parallel",),
        ),
        cost_estimate=cost,
    )(x2d, key_t_scaled_bf16, value_bf16)

    return out2d.reshape(B, S, H)


def reference_forward_kernel_numerics(x1, key_t_scaled_bf16, value_bf16):
    """Plain-JAX emulation of the kernel numerics (bf16 operands, f32 accumulate / softmax)."""
    B, S, H = x1.shape
    x = x1.reshape(B * S, H).astype(jnp.bfloat16).astype(jnp.float32)
    k = key_t_scaled_bf16.astype(jnp.float32)
    v = value_bf16.astype(jnp.float32)
    logits = jnp.matmul(x, k)
    m = jnp.max(logits, axis=-1, keepdims=True)
    e = jnp.exp(logits - m)
    denom = jnp.sum(e, axis=-1, keepdims=True)
    out = jnp.matmul(e.astype(jnp.bfloat16).astype(jnp.float32), v) / denom
    return out.reshape(B, S, H)


def reference_forward_f32(x1, key_w, value_w):
    """True f32 reference matching the original PyTorch forward exactly."""
    qk = jnp.matmul(x1, key_w.T)
    scaled_qk = qk / INV_SCALE_FACTOR
    softmax_qk = jax.nn.softmax(scaled_qk, axis=-1)
    return jnp.matmul(softmax_qk, value_w)        # dropout(p=0.0) == identity


if __name__ == "__main__":
    rng = jax.random.PRNGKey(0)
    k_x, k_key, k_value, k_query = jax.random.split(rng, 4)

    # Input matches the PyTorch script: x1 = torch.randn(1, 16, 512)
    x1 = jax.random.normal(k_x, (1, 16, HIDDEN_SIZE), dtype=jnp.float32)

    # Deterministic parameter init (shapes from the module's __init__).
    key_w = jax.random.normal(k_key, (HIDDEN_SIZE, HIDDEN_SIZE), dtype=jnp.float32)
    value_w = jax.random.normal(k_value, (HIDDEN_SIZE, HIDDEN_SIZE), dtype=jnp.float32)
    query_w = jax.random.normal(k_query, (HIDDEN_SIZE, HIDDEN_SIZE), dtype=jnp.float32)  # unused in forward (as in PyTorch)

    # One-time weight prep: fold scale, pre-transpose key, cast to bf16.
    key_t_scaled, value_b = prepare_weights(key_w, value_w)

    out = model_forward(x1, key_t_scaled, value_b)
    out = jax.block_until_ready(out)
    assert out.shape == (1, 16, HIDDEN_SIZE)

    # 1) Tight check against a reference that mirrors the kernel's numerics.
    ref = reference_forward_kernel_numerics(x1, key_t_scaled, value_b)
    assert jnp.allclose(out, ref, atol=2e-2, rtol=2e-2), "mismatch vs kernel-numerics reference"

    # 2) Sanity check against the true f32 PyTorch-equivalent reference (original weights).
    #    bf16 weight/activation rounding near softmax ties can shift a little probability
    #    mass, so this bound is loose -- it catches gross bugs (wrong transpose / scale).
    ref_f32 = reference_forward_f32(x1, key_w, value_w)
    max_abs = float(jnp.max(jnp.abs(out - ref_f32)))
    assert max_abs < 1.0, f"gross mismatch vs f32 reference (max abs diff {max_abs})"

    print("KERNEL_OK")
</pallas_src>

<mosaic_0001>
module attributes {stable_mosaic.version = 11 : i64} {
  func.func @_sdpa_like_kernel(%arg0: i32, %arg1: memref<16x512xbf16, #tpu.memory_space<vmem>>, %arg2: memref<512x512xbf16, #tpu.memory_space<vmem>>, %arg3: memref<512x512xbf16, #tpu.memory_space<vmem>>, %arg4: memref<16x512xf32, #tpu.memory_space<vmem>>) attributes {dimension_semantics = [#tpu.dimension_semantics<parallel>], iteration_bounds = array<i64: 1>, scalar_prefetch = 0 : i64, scratch_operands = 0 : i64, tpu.core_type = #tpu.core_type<tc>, window_params = [{transform_indices = @transform_0, window_bounds = array<i64: 16, 512>}, {pipeline_mode = #tpu.pipeline_mode<synchronous>, transform_indices = @transform_1, window_bounds = array<i64: 512, 512>}, {pipeline_mode = #tpu.pipeline_mode<synchronous>, transform_indices = @transform_2, window_bounds = array<i64: 512, 512>}, {transform_indices = @transform_3, window_bounds = array<i64: 16, 512>}]} {
    %c0 = arith.constant 0 : index
    %c0_0 = arith.constant 0 : index
    %0 = vector.load %arg1[%c0, %c0_0] : memref<16x512xbf16, #tpu.memory_space<vmem>>, vector<16x512xbf16>
    %c0_1 = arith.constant 0 : index
    %c0_2 = arith.constant 0 : index
    %1 = vector.load %arg2[%c0_1, %c0_2] : memref<512x512xbf16, #tpu.memory_space<vmem>>, vector<512x512xbf16>
    %cst = arith.constant dense<0.000000e+00> : vector<16x512xf32>
    %2 = tpu.matmul %0, %1, %cst {dimension_numbers = #tpu.dot_dimension_numbers<[1], [0], [0], [1], [0, 0, 1, 1], [], []>} : vector<16x512xbf16>, vector<512x512xbf16>, vector<16x512xf32> -> vector<16x512xf32>
    %cst_3 = arith.constant dense<0xFF800000> : vector<16xf32>
    %3 = vector.multi_reduction <maximumf>, %2, %cst_3 [1] : vector<16x512xf32> to vector<16xf32>
    %4 = vector.shape_cast %3 : vector<16xf32> to vector<16x1xf32>
    %5 = vector.broadcast %4 : vector<16x1xf32> to vector<16x512xf32>
    %6 = arith.subf %2, %5 : vector<16x512xf32>
    %7 = math.exp %6 : vector<16x512xf32>
    %cst_4 = arith.constant dense<0.000000e+00> : vector<16xf32>
    %8 = vector.multi_reduction <add>, %7, %cst_4 [1] : vector<16x512xf32> to vector<16xf32>
    %9 = vector.shape_cast %8 : vector<16xf32> to vector<16x1xf32>
    %10 = arith.truncf %7 : vector<16x512xf32> to vector<16x512xbf16>
    %c0_5 = arith.constant 0 : index
    %c0_6 = arith.constant 0 : index
    %11 = vector.load %arg3[%c0_5, %c0_6] : memref<512x512xbf16, #tpu.memory_space<vmem>>, vector<512x512xbf16>
    %cst_7 = arith.constant dense<0.000000e+00> : vector<16x512xf32>
    %12 = tpu.matmul %10, %11, %cst_7 {dimension_numbers = #tpu.dot_dimension_numbers<[1], [0], [0], [1], [0, 0, 1, 1], [], []>} : vector<16x512xbf16>, vector<512x512xbf16>, vector<16x512xf32> -> vector<16x512xf32>
    %13 = tpu.reciprocal %9 {approx = true} : vector<16x1xf32> -> vector<16x1xf32>
    %14 = vector.broadcast %13 : vector<16x1xf32> to vector<16x512xf32>
    %15 = arith.mulf %12, %14 : vector<16x512xf32>
    %c0_8 = arith.constant 0 : index
    %c0_9 = arith.constant 0 : index
    %16 = vector.load %arg4[%c0_8, %c0_9] : memref<16x512xf32, #tpu.memory_space<vmem>>, vector<16x512xf32>
    tpu.vector_store %arg4[%c0_8, %c0_9], %15 {strides = array<i32>} : memref<16x512xf32, #tpu.memory_space<vmem>>, vector<16x512xf32>,
    return
  }
  func.func @transform_0(%arg0: i32) -> (i32, i32) {
    %c0_i32 = arith.constant 0 : i32
    %c0_i32_0 = arith.constant 0 : i32
    return %arg0, %c0_i32 : i32, i32
  }
  func.func @transform_1(%arg0: i32) -> (i32, i32) {
    %c0_i32 = arith.constant 0 : i32
    %c0_i32_0 = arith.constant 0 : i32
    %c0_i32_1 = arith.constant 0 : i32
    return %c0_i32, %c0_i32_0 : i32, i32
  }
  func.func @transform_2(%arg0: i32) -> (i32, i32) {
    %c0_i32 = arith.constant 0 : i32
    %c0_i32_0 = arith.constant 0 : i32
    %c0_i32_1 = arith.constant 0 : i32
    return %c0_i32, %c0_i32_0 : i32, i32
  }
  func.func @transform_3(%arg0: i32) -> (i32, i32) {
    %c0_i32 = arith.constant 0 : i32
    %c0_i32_0 = arith.constant 0 : i32
    return %arg0, %c0_i32 : i32, i32
  }
}

</mosaic_0001>

<llo_original>
// kernel: tpu_custom_call.1
$region0: #{tpu_custom_call.1}
  #allocation0 [shape = 'u32[]', space=smem, size = 0x4, offset = 0x4, fixed_abs, tag = 'smem constant byte address 0x4 - core index']
  #allocation1 [shape = 'u32[72,128]{1,0:T(1,128)}', space=vmem, size = 0x9000, scoped, tag = 'internal scratch']
  %s0 = inlined_call_operand.hbm [shape: bf16[16,512], index: 0, kind: input, shape index: {}]
  %s1 = inlined_call_operand.hbm [shape: bf16[512,512], index: 1, kind: input, shape index: {}]
  %s2 = inlined_call_operand.hbm [shape: bf16[512,512], index: 2, kind: input, shape index: {}]
  %s3 = inlined_call_operand.hbm [shape: f32[16,512], index: 3, kind: output, shape index: {}]
  %s4 = sld [smem:[#allocation0]]
  $region34: #{tpu_custom_call.1} parent=0
    _
  %s6 = ssub.s32 1, %s4
  %s7 = scalar_select 0, %s6, %s4
  $region1: #{tpu_custom_call.1} parent=0
    #allocation2 [shape = 'u8[16384]{0}', space=vmem, size = 0x4000, scoped, tag = 'input window, operand 0, single buffered']
    #allocation3 [shape = 's32[1]{0}', space=sflag, size = 0x4, scoped, tag = 'scoped memory for tpu_custom_call.1']
    #allocation4 [shape = 's32[1]{0}', space=sflag, size = 0x4, scoped, tag = 'scoped memory for tpu_custom_call.1']
    #allocation5 [shape = 'u8[524288]{0}', space=vmem, size = 0x80000, scoped, tag = 'input window, operand 1, single buffered']
    #allocation6 [shape = 's32[1]{0}', space=sflag, size = 0x4, scoped, tag = 'scoped memory for tpu_custom_call.1']
    #allocation7 [shape = 'u8[524288]{0}', space=vmem, size = 0x80000, scoped, tag = 'input window, operand 2, single buffered']
    #allocation8 [shape = 'u8[32768]{0}', space=vmem, size = 0x8000, scoped, tag = 'output window, operand 0, single buffered']
    %8 = vsyncpa [#allocation3], 0
    %9 = vsyncpa [#allocation6], 0
    %10 = vsyncpa [#allocation4], 0
    // Predicated region
    $region2: #{tpu_custom_call.1} parent=1 // pred_check
      _
    $region3: #{tpu_custom_call.1} parent=1 // pred_check_branch
      %12 = sbr.rel (0) target = $region5
    $region4: #{tpu_custom_call.1} parent=1 // pred_region
      %14 = vsyncadd [#allocation3], 0
      %s15 = sshll.u32 %s0, 4
      %s16 = int_to_ptr.hbm [resolvable:$true] %s15
      %s17 = sshll.u32 [#allocation2], 4
      %s18 = int_to_ptr.vmem [resolvable:$true] %s17
      %23 = dma.hbm_to_vmem [thread:$0]  %s16, 512, %s18, [#allocation3], 256, 256, 16
    $region5: #{tpu_custom_call.1} parent=1 // pred_fallthru
      _
    // Predicated region
    $region6: #{tpu_custom_call.1} parent=1 // pred_check
      _
    $region7: #{tpu_custom_call.1} parent=1 // pred_check_branch
      %25 = sbr.rel (0) target = $region9
    $region8: #{tpu_custom_call.1} parent=1 // pred_region
      %27 = vsyncadd [#allocation6], 0
      %s28 = sshll.u32 %s1, 4
      %s29 = int_to_ptr.hbm [resolvable:$true] %s28
      %s30 = sshll.u32 [#allocation5], 4
      %s31 = int_to_ptr.vmem [resolvable:$true] %s30
      %36 = dma.hbm_to_vmem [thread:$0]  %s29, 16384, %s31, [#allocation6], 256, 256, 16
    $region9: #{tpu_custom_call.1} parent=1 // pred_fallthru
      _
    // Predicated region
    $region10: #{tpu_custom_call.1} parent=1 // pred_check
      _
    $region11: #{tpu_custom_call.1} parent=1 // pred_check_branch
      %38 = sbr.rel (0) target = $region13
    $region12: #{tpu_custom_call.1} parent=1 // pred_region
      %40 = vsyncadd [#allocation6], 0
      %s41 = sshll.u32 %s2, 4
      %s42 = int_to_ptr.hbm [resolvable:$true] %s41
      %s43 = sshll.u32 [#allocation7], 4
      %s44 = int_to_ptr.vmem [resolvable:$true] %s43
      %49 = dma.hbm_to_vmem [thread:$0]  %s42, 16384, %s44, [#allocation6], 256, 256, 16
    $region13: #{tpu_custom_call.1} parent=1 // pred_fallthru
      _
    // Predicated region
    $region14: #{tpu_custom_call.1} parent=1 // pred_check
      _
    $region15: #{tpu_custom_call.1} parent=1 // pred_check_branch
      %51 = sbr.rel (0) target = $region17
    $region16: #{tpu_custom_call.1} parent=1 // pred_region
      %53 = dma.done [#allocation3], 512
    $region17: #{tpu_custom_call.1} parent=1 // pred_fallthru
      _
    // Predicated region
    $region18: #{tpu_custom_call.1} parent=1 // pred_check
      _
    $region19: #{tpu_custom_call.1} parent=1 // pred_check_branch
      %55 = sbr.rel (0) target = $region21
    $region20: #{tpu_custom_call.1} parent=1 // pred_region
      %57 = dma.done [#allocation6], 16384
    $region21: #{tpu_custom_call.1} parent=1 // pred_fallthru
      _
    // Predicated region
    $region22: #{tpu_custom_call.1} parent=1 // pred_check
      _
    $region23: #{tpu_custom_call.1} parent=1 // pred_check_branch
      %59 = sbr.rel (0) target = $region25
    $region24: #{tpu_custom_call.1} parent=1 // pred_region
      %61 = dma.done [#allocation6], 16384
    $region25: #{tpu_custom_call.1} parent=1 // pred_fallthru
      _
    %v62 = vld [vmem:[#allocation2] sm:$0xff]
    %v63 = vld [vmem:[#allocation2 + $0x8] sm:$0xff]
    %v64 = vld [vmem:[#allocation2 + $0x10] sm:$0xff]
    %v65 = vld [vmem:[#allocation2 + $0x18] sm:$0xff]
    %v66 = vld [vmem:[#allocation5] sm:$0xff]
    %v67 = vld [vmem:[#allocation5 + $0x8] sm:$0xff]
    %v68 = vld [vmem:[#allocation5 + $0x10] sm:$0xff]
    %v69 = vld [vmem:[#allocation5 + $0x18] sm:$0xff]
    %v70 = vld [vmem:[#allocation5 + $0x20] sm:$0xff]
    %v71 = vld [vmem:[#allocation5 + $0x28] sm:$0xff]
    %v72 = vld [vmem:[#allocation5 + $0x30] sm:$0xff]
    %v73 = vld [vmem:[#allocation5 + $0x38] sm:$0xff]
    %v74 = vld [vmem:[#allocation5 + $0x40] sm:$0xff]
    %v75 = vld [vmem:[#allocation5 + $0x48] sm:$0xff]
    %v76 = vld [vmem:[#allocation5 + $0x50] sm:$0xff]
    %v77 = vld [vmem:[#allocation5 + $0x58] sm:$0xff]
    %v78 = vld [vmem:[#allocation5 + $0x60] sm:$0xff]
    %v79 = vld [vmem:[#allocation5 + $0x68] sm:$0xff]
    %v80 = vld [vmem:[#allocation5 + $0x70] sm:$0xff]
    %v81 = vld [vmem:[#allocation5 + $0x78] sm:$0xff]
    %v82 = vld [vmem:[#allocation5 + $0x80] sm:$0xff]
    %v83 = vld [vmem:[#allocation5 + $0x88] sm:$0xff]
    %v84 = vld [vmem:[#allocation5 + $0x90] sm:$0xff]
    %v85 = vld [vmem:[#allocation5 + $0x98] sm:$0xff]
    %v86 = vld [vmem:[#allocation5 + $0xa0] sm:$0xff]
    %v87 = vld [vmem:[#allocation5 + $0xa8] sm:$0xff]
    %v88 = vld [vmem:[#allocation5 + $0xb0] sm:$0xff]
    %v89 = vld [vmem:[#allocation5 + $0xb8] sm:$0xff]
    %v90 = vld [vmem:[#allocation5 + $0xc0] sm:$0xff]
    %v91 = vld [vmem:[#allocation5 + $0xc8] sm:$0xff]
    %v92 = vld [vmem:[#allocation5 + $0xd0] sm:$0xff]
    %v93 = vld [vmem:[#allocation5 + $0xd8] sm:$0xff]
    %v94 = vld [vmem:[#allocation5 + $0xe0] sm:$0xff]
    %v95 = vld [vmem:[#allocation5 + $0xe8] sm:$0xff]
    %v96 = vld [vmem:[#allocation5 + $0xf0] sm:$0xff]
    %v97 = vld [vmem:[#allocation5 + $0xf8] sm:$0xff]
    %v98 = vld [vmem:[#allocation5 + $0x100] sm:$0xff]
    %v99 = vld [vmem:[#allocation5 + $0x108] sm:$0xff]
    %v100 = vld [vmem:[#allocation5 + $0x110] sm:$0xff]
    %v101 = vld [vmem:[#allocation5 + $0x118] sm:$0xff]
    %v102 = vld [vmem:[#allocation5 + $0x120] sm:$0xff]
    %v103 = vld [vmem:[#allocation5 + $0x128] sm:$0xff]
    %v104 = vld [vmem:[#allocation5 + $0x130] sm:$0xff]
    %v105 = vld [vmem:[#allocation5 + $0x138] sm:$0xff]
    %v106 = vld [vmem:[#allocation5 + $0x140] sm:$0xff]
    %v107 = vld [vmem:[#allocation5 + $0x148] sm:$0xff]
    %v108 = vld [vmem:[#allocation5 + $0x150] sm:$0xff]
    %v109 = vld [vmem:[#allocation5 + $0x158] sm:$0xff]
    %v110 = vld [vmem:[#allocation5 + $0x160] sm:$0xff]
    %v111 = vld [vmem:[#allocation5 + $0x168] sm:$0xff]
    %v112 = vld [vmem:[#allocation5 + $0x170] sm:$0xff]
    %v113 = vld [vmem:[#allocation5 + $0x178] sm:$0xff]
    %v114 = vld [vmem:[#allocation5 + $0x180] sm:$0xff]
    %v115 = vld [vmem:[#allocation5 + $0x188] sm:$0xff]
    %v116 = vld [vmem:[#allocation5 + $0x190] sm:$0xff]
    %v117 = vld [vmem:[#allocation5 + $0x198] sm:$0xff]
    %v118 = vld [vmem:[#allocation5 + $0x1a0] sm:$0xff]
    %v119 = vld [vmem:[#allocation5 + $0x1a8] sm:$0xff]
    %v120 = vld [vmem:[#allocation5 + $0x1b0] sm:$0xff]
    %v121 = vld [vmem:[#allocation5 + $0x1b8] sm:$0xff]
    %v122 = vld [vmem:[#allocation5 + $0x1c0] sm:$0xff]
    %v123 = vld [vmem:[#allocation5 + $0x1c8] sm:$0xff]
    %v124 = vld [vmem:[#allocation5 + $0x1d0] sm:$0xff]
    %v125 = vld [vmem:[#allocation5 + $0x1d8] sm:$0xff]
    %v126 = vld [vmem:[#allocation5 + $0x1e0] sm:$0xff]
    %v127 = vld [vmem:[#allocation5 + $0x1e8] sm:$0xff]
    %v128 = vld [vmem:[#allocation5 + $0x1f0] sm:$0xff]
    %v129 = vld [vmem:[#allocation5 + $0x1f8] sm:$0xff]
    %v130 = vld [vmem:[#allocation5 + $0x200] sm:$0xff]
    %v131 = vld [vmem:[#allocation5 + $0x208] sm:$0xff]
    %v132 = vld [vmem:[#allocation5 + $0x210] sm:$0xff]
    %v133 = vld [vmem:[#allocation5 + $0x218] sm:$0xff]
    %v134 = vld [vmem:[#allocation5 + $0x220] sm:$0xff]
    %v135 = vld [vmem:[#allocation5 + $0x228] sm:$0xff]
    %v136 = vld [vmem:[#allocation5 + $0x230] sm:$0xff]
    %v137 = vld [vmem:[#allocation5 + $0x238] sm:$0xff]
    %v138 = vld [vmem:[#allocation5 + $0x240] sm:$0xff]
    %v139 = vld [vmem:[#allocation5 + $0x248] sm:$0xff]
    %v140 = vld [vmem:[#allocation5 + $0x250] sm:$0xff]
    %v141 = vld [vmem:[#allocation5 + $0x258] sm:$0xff]
    %v142 = vld [vmem:[#allocation5 + $0x260] sm:$0xff]
    %v143 = vld [vmem:[#allocation5 + $0x268] sm:$0xff]
    %v144 = vld [vmem:[#allocation5 + $0x270] sm:$0xff]
    %v145 = vld [vmem:[#allocation5 + $0x278] sm:$0xff]
    %v146 = vld [vmem:[#allocation5 + $0x280] sm:$0xff]
    %v147 = vld [vmem:[#allocation5 + $0x288] sm:$0xff]
    %v148 = vld [vmem:[#allocation5 + $0x290] sm:$0xff]
    %v149 = vld [vmem:[#allocation5 + $0x298] sm:$0xff]
    %v150 = vld [vmem:[#allocation5 + $0x2a0] sm:$0xff]
    %v151 = vld [vmem:[#allocation5 + $0x2a8] sm:$0xff]
    %v152 = vld [vmem:[#allocation5 + $0x2b0] sm:$0xff]
    %v153 = vld [vmem:[#allocation5 + $0x2b8] sm:$0xff]
    %v154 = vld [vmem:[#allocation5 + $0x2c0] sm:$0xff]
    %v155 = vld [vmem:[#allocation5 + $0x2c8] sm:$0xff]
    %v156 = vld [vmem:[#allocation5 + $0x2d0] sm:$0xff]
    %v157 = vld [vmem:[#allocation5 + $0x2d8] sm:$0xff]
    %v158 = vld [vmem:[#allocation5 + $0x2e0] sm:$0xff]
    %v159 = vld [vmem:[#allocation5 + $0x2e8] sm:$0xff]
    %v160 = vld [vmem:[#allocation5 + $0x2f0] sm:$0xff]
    %v161 = vld [vmem:[#allocation5 + $0x2f8] sm:$0xff]
    %v162 = vld [vmem:[#allocation5 + $0x300] sm:$0xff]
    %v163 = vld [vmem:[#allocation5 + $0x308] sm:$0xff]
    %v164 = vld [vmem:[#allocation5 + $0x310] sm:$0xff]
    %v165 = vld [vmem:[#allocation5 + $0x318] sm:$0xff]
    %v166 = vld [vmem:[#allocation5 + $0x320] sm:$0xff]
    %v167 = vld [vmem:[#allocation5 + $0x328] sm:$0xff]
    %v168 = vld [vmem:[#allocation5 + $0x330] sm:$0xff]
    %v169 = vld [vmem:[#allocation5 + $0x338] sm:$0xff]
    %v170 = vld [vmem:[#allocation5 + $0x340] sm:$0xff]
    %v171 = vld [vmem:[#allocation5 + $0x348] sm:$0xff]
    %v172 = vld [vmem:[#allocation5 + $0x350] sm:$0xff]
    %v173 = vld [vmem:[#allocation5 + $0x358] sm:$0xff]
    %v174 = vld [vmem:[#allocation5 + $0x360] sm:$0xff]
    %v175 = vld [vmem:[#allocation5 + $0x368] sm:$0xff]
    %v176 = vld [vmem:[#allocation5 + $0x370] sm:$0xff]
    %v177 = vld [vmem:[#allocation5 + $0x378] sm:$0xff]
    %v178 = vld [vmem:[#allocation5 + $0x380] sm:$0xff]
    %v179 = vld [vmem:[#allocation5 + $0x388] sm:$0xff]
    %v180 = vld [vmem:[#allocation5 + $0x390] sm:$0xff]
    %v181 = vld [vmem:[#allocation5 + $0x398] sm:$0xff]
    %v182 = vld [vmem:[#allocation5 + $0x3a0] sm:$0xff]
    %v183 = vld [vmem:[#allocation5 + $0x3a8] sm:$0xff]
    %v184 = vld [vmem:[#allocation5 + $0x3b0] sm:$0xff]
    %v185 = vld [vmem:[#allocation5 + $0x3b8] sm:$0xff]
    %v186 = vld [vmem:[#allocation5 + $0x3c0] sm:$0xff]
    %v187 = vld [vmem:[#allocation5 + $0x3c8] sm:$0xff]
    %v188 = vld [vmem:[#allocation5 + $0x3d0] sm:$0xff]
    %v189 = vld [vmem:[#allocation5 + $0x3d8] sm:$0xff]
    %v190 = vld [vmem:[#allocation5 + $0x3e0] sm:$0xff]
    %v191 = vld [vmem:[#allocation5 + $0x3e8] sm:$0xff]
    %v192 = vld [vmem:[#allocation5 + $0x3f0] sm:$0xff]
    %v193 = vld [vmem:[#allocation5 + $0x3f8] sm:$0xff]
    %v198 = vunpack.c.l.b16 %v62
    %v199 = vunpack.c.h.b16 %v62
    %v200 = vunpack.c.l.b16 %v63
    %v201 = vunpack.c.h.b16 %v63
    %v202 = vunpack.c.l.b16 %v64
    %v203 = vunpack.c.h.b16 %v64
    %v204 = vunpack.c.l.b16 %v65
    %v205 = vunpack.c.h.b16 %v65
    %v206 = vpack.c.b16 %v202, %v198
    %v207 = vpack.c.b16 %v203, %v199
    %v208 = vpack.c.b16 %v204, %v200
    %v209 = vpack.c.b16 %v205, %v201
    %v342 = vunpack.c.l.b16 %v66
    %v343 = vunpack.c.h.b16 %v66
    %v344 = vunpack.c.l.b16 %v67
    %v345 = vunpack.c.h.b16 %v67
    %v346 = vunpack.c.l.b16 %v68
    %v347 = vunpack.c.h.b16 %v68
    %v348 = vunpack.c.l.b16 %v69
    %v349 = vunpack.c.h.b16 %v69
    %v350 = vunpack.c.l.b16 %v70
    %v351 = vunpack.c.h.b16 %v70
    %v352 = vunpack.c.l.b16 %v71
    %v353 = vunpack.c.h.b16 %v71
    %v354 = vunpack.c.l.b16 %v72
    %v355 = vunpack.c.h.b16 %v72
    %v356 = vunpack.c.l.b16 %v73
    %v357 = vunpack.c.h.b16 %v73
    %v358 = vunpack.c.l.b16 %v74
    %v359 = vunpack.c.h.b16 %v74
    %v360 = vunpack.c.l.b16 %v75
    %v361 = vunpack.c.h.b16 %v75
    %v362 = vunpack.c.l.b16 %v76
    %v363 = vunpack.c.h.b16 %v76
    %v364 = vunpack.c.l.b16 %v77
    %v365 = vunpack.c.h.b16 %v77
    %v366 = vunpack.c.l.b16 %v78
    %v367 = vunpack.c.h.b16 %v78
    %v368 = vunpack.c.l.b16 %v79
    %v369 = vunpack.c.h.b16 %v79
    %v370 = vunpack.c.l.b16 %v80
    %v371 = vunpack.c.h.b16 %v80
    %v372 = vunpack.c.l.b16 %v81
    %v373 = vunpack.c.h.b16 %v81
    %v374 = vunpack.c.l.b16 %v82
    %v375 = vunpack.c.h.b16 %v82
    %v376 = vunpack.c.l.b16 %v83
    %v377 = vunpack.c.h.b16 %v83
    %v378 = vunpack.c.l.b16 %v84
    %v379 = vunpack.c.h.b16 %v84
    %v380 = vunpack.c.l.b16 %v85
    %v381 = vunpack.c.h.b16 %v85
    %v382 = vunpack.c.l.b16 %v86
    %v383 = vunpack.c.h.b16 %v86
    %v384 = vunpack.c.l.b16 %v87
    %v385 = vunpack.c.h.b16 %v87
    %v386 = vunpack.c.l.b16 %v88
    %v387 = vunpack.c.h.b16 %v88
    %v388 = vunpack.c.l.b16 %v89
    %v389 = vunpack.c.h.b16 %v89
    %v390 = vunpack.c.l.b16 %v90
    %v391 = vunpack.c.h.b16 %v90
    %v392 = vunpack.c.l.b16 %v91
    %v393 = vunpack.c.h.b16 %v91
    %v394 = vunpack.c.l.b16 %v92
    %v395 = vunpack.c.h.b16 %v92
    %v396 = vunpack.c.l.b16 %v93
    %v397 = vunpack.c.h.b16 %v93
    %v398 = vunpack.c.l.b16 %v94
    %v399 = vunpack.c.h.b16 %v94
    %v400 = vunpack.c.l.b16 %v95
    %v401 = vunpack.c.h.b16 %v95
    %v402 = vunpack.c.l.b16 %v96
    %v403 = vunpack.c.h.b16 %v96
    %v404 = vunpack.c.l.b16 %v97
    %v405 = vunpack.c.h.b16 %v97
    %v406 = vunpack.c.l.b16 %v98
    %v407 = vunpack.c.h.b16 %v98
    %v408 = vunpack.c.l.b16 %v99
    %v409 = vunpack.c.h.b16 %v99
    %v410 = vunpack.c.l.b16 %v100
    %v411 = vunpack.c.h.b16 %v100
    %v412 = vunpack.c.l.b16 %v101
    %v413 = vunpack.c.h.b16 %v101
    %v414 = vunpack.c.l.b16 %v102
    %v415 = vunpack.c.h.b16 %v102
    %v416 = vunpack.c.l.b16 %v103
    %v417 = vunpack.c.h.b16 %v103
    %v418 = vunpack.c.l.b16 %v104
    %v419 = vunpack.c.h.b16 %v104
    %v420 = vunpack.c.l.b16 %v105
    %v421 = vunpack.c.h.b16 %v105
    %v422 = vunpack.c.l.b16 %v106
    %v423 = vunpack.c.h.b16 %v106
    %v424 = vunpack.c.l.b16 %v107
    %v425 = vunpack.c.h.b16 %v107
    %v426 = vunpack.c.l.b16 %v108
    %v427 = vunpack.c.h.b16 %v108
    %v428 = vunpack.c.l.b16 %v109
    %v429 = vunpack.c.h.b16 %v109
    %v430 = vunpack.c.l.b16 %v110
    %v431 = vunpack.c.h.b16 %v110
    %v432 = vunpack.c.l.b16 %v111
    %v433 = vunpack.c.h.b16 %v111
    %v434 = vunpack.c.l.b16 %v112
    %v435 = vunpack.c.h.b16 %v112
    %v436 = vunpack.c.l.b16 %v113
    %v437 = vunpack.c.h.b16 %v113
    %v438 = vunpack.c.l.b16 %v114
    %v439 = vunpack.c.h.b16 %v114
    %v440 = vunpack.c.l.b16 %v115
    %v441 = vunpack.c.h.b16 %v115
    %v442 = vunpack.c.l.b16 %v116
    %v443 = vunpack.c.h.b16 %v116
    %v444 = vunpack.c.l.b16 %v117
    %v445 = vunpack.c.h.b16 %v117
    %v446 = vunpack.c.l.b16 %v118
    %v447 = vunpack.c.h.b16 %v118
    %v448 = vunpack.c.l.b16 %v119
    %v449 = vunpack.c.h.b16 %v119
    %v450 = vunpack.c.l.b16 %v120
    %v451 = vunpack.c.h.b16 %v120
    %v452 = vunpack.c.l.b16 %v121
    %v453 = vunpack.c.h.b16 %v121
    %v454 = vunpack.c.l.b16 %v122
    %v455 = vunpack.c.h.b16 %v122
    %v456 = vunpack.c.l.b16 %v123
    %v457 = vunpack.c.h.b16 %v123
    %v458 = vunpack.c.l.b16 %v124
    %v459 = vunpack.c.h.b16 %v124
    %v460 = vunpack.c.l.b16 %v125
    %v461 = vunpack.c.h.b16 %v125
    %v462 = vunpack.c.l.b16 %v126
    %v463 = vunpack.c.h.b16 %v126
    %v464 = vunpack.c.l.b16 %v127
    %v465 = vunpack.c.h.b16 %v127
    %v466 = vunpack.c.l.b16 %v128
    %v467 = vunpack.c.h.b16 %v128
    %v468 = vunpack.c.l.b16 %v129
    %v469 = vunpack.c.h.b16 %v129
    %v470 = vunpack.c.l.b16 %v130
    %v471 = vunpack.c.h.b16 %v130
    %v472 = vunpack.c.l.b16 %v131
    %v473 = vunpack.c.h.b16 %v131
    %v474 = vunpack.c.l.b16 %v132
    %v475 = vunpack.c.h.b16 %v132
    %v476 = vunpack.c.l.b16 %v133
    %v477 = vunpack.c.h.b16 %v133
    %v478 = vunpack.c.l.b16 %v134
    %v479 = vunpack.c.h.b16 %v134
    %v480 = vunpack.c.l.b16 %v135
    %v481 = vunpack.c.h.b16 %v135
    %v482 = vunpack.c.l.b16 %v136
    %v483 = vunpack.c.h.b16 %v136
    %v484 = vunpack.c.l.b16 %v137
    %v485 = vunpack.c.h.b16 %v137
    %v486 = vunpack.c.l.b16 %v138
    %v487 = vunpack.c.h.b16 %v138
    %v488 = vunpack.c.l.b16 %v139
    %v489 = vunpack.c.h.b16 %v139
    %v490 = vunpack.c.l.b16 %v140
    %v491 = vunpack.c.h.b16 %v140
    %v492 = vunpack.c.l.b16 %v141
    %v493 = vunpack.c.h.b16 %v141
    %v494 = vunpack.c.l.b16 %v142
    %v495 = vunpack.c.h.b16 %v142
    %v496 = vunpack.c.l.b16 %v143
    %v497 = vunpack.c.h.b16 %v143
    %v498 = vunpack.c.l.b16 %v144
    %v499 = vunpack.c.h.b16 %v144
    %v500 = vunpack.c.l.b16 %v145
    %v501 = vunpack.c.h.b16 %v145
    %v502 = vunpack.c.l.b16 %v146
    %v503 = vunpack.c.h.b16 %v146
    %v504 = vunpack.c.l.b16 %v147
    %v505 = vunpack.c.h.b16 %v147
    %v506 = vunpack.c.l.b16 %v148
    %v507 = vunpack.c.h.b16 %v148
    %v508 = vunpack.c.l.b16 %v149
    %v509 = vunpack.c.h.b16 %v149
    %v510 = vunpack.c.l.b16 %v150
    %v511 = vunpack.c.h.b16 %v150
    %v512 = vunpack.c.l.b16 %v151
    %v513 = vunpack.c.h.b16 %v151
    %v514 = vunpack.c.l.b16 %v152
    %v515 = vunpack.c.h.b16 %v152
    %v516 = vunpack.c.l.b16 %v153
    %v517 = vunpack.c.h.b16 %v153
    %v518 = vunpack.c.l.b16 %v154
    %v519 = vunpack.c.h.b16 %v154
    %v520 = vunpack.c.l.b16 %v155
    %v521 = vunpack.c.h.b16 %v155
    %v522 = vunpack.c.l.b16 %v156
    %v523 = vunpack.c.h.b16 %v156
    %v524 = vunpack.c.l.b16 %v157
    %v525 = vunpack.c.h.b16 %v157
    %v526 = vunpack.c.l.b16 %v158
    %v527 = vunpack.c.h.b16 %v158
    %v528 = vunpack.c.l.b16 %v159
    %v529 = vunpack.c.h.b16 %v159
    %v530 = vunpack.c.l.b16 %v160
    %v531 = vunpack.c.h.b16 %v160
    %v532 = vunpack.c.l.b16 %v161
    %v533 = vunpack.c.h.b16 %v161
    %v534 = vunpack.c.l.b16 %v162
    %v535 = vunpack.c.h.b16 %v162
    %v536 = vunpack.c.l.b16 %v163
    %v537 = vunpack.c.h.b16 %v163
    %v538 = vunpack.c.l.b16 %v164
    %v539 = vunpack.c.h.b16 %v164
    %v540 = vunpack.c.l.b16 %v165
    %v541 = vunpack.c.h.b16 %v165
    %v542 = vunpack.c.l.b16 %v166
    %v543 = vunpack.c.h.b16 %v166
    %v544 = vunpack.c.l.b16 %v167
    %v545 = vunpack.c.h.b16 %v167
    %v546 = vunpack.c.l.b16 %v168
    %v547 = vunpack.c.h.b16 %v168
    %v548 = vunpack.c.l.b16 %v169
    %v549 = vunpack.c.h.b16 %v169
    %v550 = vunpack.c.l.b16 %v170
    %v551 = vunpack.c.h.b16 %v170
    %v552 = vunpack.c.l.b16 %v171
    %v553 = vunpack.c.h.b16 %v171
    %v554 = vunpack.c.l.b16 %v172
    %v555 = vunpack.c.h.b16 %v172
    %v556 = vunpack.c.l.b16 %v173
    %v557 = vunpack.c.h.b16 %v173
    %v558 = vunpack.c.l.b16 %v174
    %v559 = vunpack.c.h.b16 %v174
    %v560 = vunpack.c.l.b16 %v175
    %v561 = vunpack.c.h.b16 %v175
    %v562 = vunpack.c.l.b16 %v176
    %v563 = vunpack.c.h.b16 %v176
    %v564 = vunpack.c.l.b16 %v177
    %v565 = vunpack.c.h.b16 %v177
    %v566 = vunpack.c.l.b16 %v178
    %v567 = vunpack.c.h.b16 %v178
    %v568 = vunpack.c.l.b16 %v179
    %v569 = vunpack.c.h.b16 %v179
    %v570 = vunpack.c.l.b16 %v180
    %v571 = vunpack.c.h.b16 %v180
    %v572 = vunpack.c.l.b16 %v181
    %v573 = vunpack.c.h.b16 %v181
    %v574 = vunpack.c.l.b16 %v182
    %v575 = vunpack.c.h.b16 %v182
    %v576 = vunpack.c.l.b16 %v183
    %v577 = vunpack.c.h.b16 %v183
    %v578 = vunpack.c.l.b16 %v184
    %v579 = vunpack.c.h.b16 %v184
    %v580 = vunpack.c.l.b16 %v185
    %v581 = vunpack.c.h.b16 %v185
    %v582 = vunpack.c.l.b16 %v186
    %v583 = vunpack.c.h.b16 %v186
    %v584 = vunpack.c.l.b16 %v187
    %v585 = vunpack.c.h.b16 %v187
    %v586 = vunpack.c.l.b16 %v188
    %v587 = vunpack.c.h.b16 %v188
    %v588 = vunpack.c.l.b16 %v189
    %v589 = vunpack.c.h.b16 %v189
    %v590 = vunpack.c.l.b16 %v190
    %v591 = vunpack.c.h.b16 %v190
    %v592 = vunpack.c.l.b16 %v191
    %v593 = vunpack.c.h.b16 %v191
    %v594 = vunpack.c.l.b16 %v192
    %v595 = vunpack.c.h.b16 %v192
    %v596 = vunpack.c.l.b16 %v193
    %v597 = vunpack.c.h.b16 %v193
    %v598 = vpack.c.b16 %v346, %v342
    %v599 = vpack.c.b16 %v347, %v343
    %v600 = vpack.c.b16 %v348, %v344
    %v601 = vpack.c.b16 %v349, %v345
    %v602 = vpack.c.b16 %v354, %v350
    %v603 = vpack.c.b16 %v355, %v351
    %v604 = vpack.c.b16 %v356, %v352
    %v605 = vpack.c.b16 %v357, %v353
    %v606 = vpack.c.b16 %v362, %v358
    %v607 = vpack.c.b16 %v363, %v359
    %v608 = vpack.c.b16 %v364, %v360
    %v609 = vpack.c.b16 %v365, %v361
    %v610 = vpack.c.b16 %v370, %v366
    %v611 = vpack.c.b16 %v371, %v367
    %v612 = vpack.c.b16 %v372, %v368
    %v613 = vpack.c.b16 %v373, %v369
    %v614 = vpack.c.b16 %v378, %v374
    %v615 = vpack.c.b16 %v379, %v375
    %v616 = vpack.c.b16 %v380, %v376
    %v617 = vpack.c.b16 %v381, %v377
    %v618 = vpack.c.b16 %v386, %v382
    %v619 = vpack.c.b16 %v387, %v383
    %v620 = vpack.c.b16 %v388, %v384
    %v621 = vpack.c.b16 %v389, %v385
    %v622 = vpack.c.b16 %v394, %v390
    %v623 = vpack.c.b16 %v395, %v391
    %v624 = vpack.c.b16 %v396, %v392
    %v625 = vpack.c.b16 %v397, %v393
    %v626 = vpack.c.b16 %v402, %v398
    %v627 = vpack.c.b16 %v403, %v399
    %v628 = vpack.c.b16 %v404, %v400
    %v629 = vpack.c.b16 %v405, %v401
    %v630 = vpack.c.b16 %v410, %v406
    %v631 = vpack.c.b16 %v411, %v407
    %v632 = vpack.c.b16 %v412, %v408
    %v633 = vpack.c.b16 %v413, %v409
    %v634 = vpack.c.b16 %v418, %v414
    %v635 = vpack.c.b16 %v419, %v415
    %v636 = vpack.c.b16 %v420, %v416
    %v637 = vpack.c.b16 %v421, %v417
    %v638 = vpack.c.b16 %v426, %v422
    %v639 = vpack.c.b16 %v427, %v423
    %v640 = vpack.c.b16 %v428, %v424
    %v641 = vpack.c.b16 %v429, %v425
    %v642 = vpack.c.b16 %v434, %v430
    %v643 = vpack.c.b16 %v435, %v431
    %v644 = vpack.c.b16 %v436, %v432
    %v645 = vpack.c.b16 %v437, %v433
    %v646 = vpack.c.b16 %v442, %v438
    %v647 = vpack.c.b16 %v443, %v439
    %v648 = vpack.c.b16 %v444, %v440
    %v649 = vpack.c.b16 %v445, %v441
    %v650 = vpack.c.b16 %v450, %v446
    %v651 = vpack.c.b16 %v451, %v447
    %v652 = vpack.c.b16 %v452, %v448
    %v653 = vpack.c.b16 %v453, %v449
    %v654 = vpack.c.b16 %v458, %v454
    %v655 = vpack.c.b16 %v459, %v455
    %v656 = vpack.c.b16 %v460, %v456
    %v657 = vpack.c.b16 %v461, %v457
    %v658 = vpack.c.b16 %v466, %v462
    %v659 = vpack.c.b16 %v467, %v463
    %v660 = vpack.c.b16 %v468, %v464
    %v661 = vpack.c.b16 %v469, %v465
    %v662 = vpack.c.b16 %v474, %v470
    %v663 = vpack.c.b16 %v475, %v471
    %v664 = vpack.c.b16 %v476, %v472
    %v665 = vpack.c.b16 %v477, %v473
    %v666 = vpack.c.b16 %v482, %v478
    %v667 = vpack.c.b16 %v483, %v479
    %v668 = vpack.c.b16 %v484, %v480
    %v669 = vpack.c.b16 %v485, %v481
    %v670 = vpack.c.b16 %v490, %v486
    %v671 = vpack.c.b16 %v491, %v487
    %v672 = vpack.c.b16 %v492, %v488
    %v673 = vpack.c.b16 %v493, %v489
    %v674 = vpack.c.b16 %v498, %v494
    %v675 = vpack.c.b16 %v499, %v495
    %v676 = vpack.c.b16 %v500, %v496
    %v677 = vpack.c.b16 %v501, %v497
    %v678 = vpack.c.b16 %v506, %v502
    %v679 = vpack.c.b16 %v507, %v503
    %v680 = vpack.c.b16 %v508, %v504
    %v681 = vpack.c.b16 %v509, %v505
    %v682 = vpack.c.b16 %v514, %v510
    %v683 = vpack.c.b16 %v515, %v511
    %v684 = vpack.c.b16 %v516, %v512
    %v685 = vpack.c.b16 %v517, %v513
    %v686 = vpack.c.b16 %v522, %v518
    %v687 = vpack.c.b16 %v523, %v519
    %v688 = vpack.c.b16 %v524, %v520
    %v689 = vpack.c.b16 %v525, %v521
    %v690 = vpack.c.b16 %v530, %v526
    %v691 = vpack.c.b16 %v531, %v527
    %v692 = vpack.c.b16 %v532, %v528
    %v693 = vpack.c.b16 %v533, %v529
    %v694 = vpack.c.b16 %v538, %v534
    %v695 = vpack.c.b16 %v539, %v535
    %v696 = vpack.c.b16 %v540, %v536
    %v697 = vpack.c.b16 %v541, %v537
    %v698 = vpack.c.b16 %v546, %v542
    %v699 = vpack.c.b16 %v547, %v543
    %v700 = vpack.c.b16 %v548, %v544
    %v701 = vpack.c.b16 %v549, %v545
    %v702 = vpack.c.b16 %v554, %v550
    %v703 = vpack.c.b16 %v555, %v551
    %v704 = vpack.c.b16 %v556, %v552
    %v705 = vpack.c.b16 %v557, %v553
    %v706 = vpack.c.b16 %v562, %v558
    %v707 = vpack.c.b16 %v563, %v559
    %v708 = vpack.c.b16 %v564, %v560
    %v709 = vpack.c.b16 %v565, %v561
    %v710 = vpack.c.b16 %v570, %v566
    %v711 = vpack.c.b16 %v571, %v567
    %v712 = vpack.c.b16 %v572, %v568
    %v713 = vpack.c.b16 %v573, %v569
    %v714 = vpack.c.b16 %v578, %v574
    %v715 = vpack.c.b16 %v579, %v575
    %v716 = vpack.c.b16 %v580, %v576
    %v717 = vpack.c.b16 %v581, %v577
    %v718 = vpack.c.b16 %v586, %v582
    %v719 = vpack.c.b16 %v587, %v583
    %v720 = vpack.c.b16 %v588, %v584
    %v721 = vpack.c.b16 %v589, %v585
    %v722 = vpack.c.b16 %v594, %v590
    %v723 = vpack.c.b16 %v595, %v591
    %v724 = vpack.c.b16 %v596, %v592
    %v725 = vpack.c.b16 %v597, %v593
    %854 = vmatpush.bf16.msra.mxu0 %v626
    %855 = vmatpush.bf16.msra.mxu0 %v622
    %856 = vmatpush.bf16.msra.mxu0 %v618
    %857 = vmatpush.bf16.msra.mxu0 %v614
    %858 = vmatpush.bf16.msra.mxu0 %v610
    %859 = vmatpush.bf16.msra.mxu0 %v606
    %860 = vmatpush.bf16.msra.mxu0 %v602
    %861 = vmatpush.bf16.msra.mxu0 %v598
    %862 = vmatmul.bf16.gmra.mxu0 %v206
    %v863 = vpop.f32.mrf.mxu0
    %v864 = vadd.f32 0.0, %v863
    %v865 = vpop.f32.mrf.mxu0
    %v866 = vadd.f32 0.0, %v865
    %867 = vdwg.mxu0
    %868 = vmatpush.bf16.msra.mxu0 %v658
    %869 = vmatpush.bf16.msra.mxu0 %v654
    %870 = vmatpush.bf16.msra.mxu0 %v650
    %871 = vmatpush.bf16.msra.mxu0 %v646
    %872 = vmatpush.bf16.msra.mxu0 %v642
    %873 = vmatpush.bf16.msra.mxu0 %v638
    %874 = vmatpush.bf16.msra.mxu0 %v634
    %875 = vmatpush.bf16.msra.mxu0 %v630
    %876 = vmatmul.bf16.gmra.mxu0 %v207
    %v877 = vpop.f32.mrf.mxu0
    %v878 = vadd.f32 %v864, %v877
    %v879 = vpop.f32.mrf.mxu0
    %v880 = vadd.f32 %v866, %v879
    %881 = vdwg.mxu0
    %882 = vmatpush.bf16.msra.mxu0 %v690
    %883 = vmatpush.bf16.msra.mxu0 %v686
    %884 = vmatpush.bf16.msra.mxu0 %v682
    %885 = vmatpush.bf16.msra.mxu0 %v678
    %886 = vmatpush.bf16.msra.mxu0 %v674
    %887 = vmatpush.bf16.msra.mxu0 %v670
    %888 = vmatpush.bf16.msra.mxu0 %v666
    %889 = vmatpush.bf16.msra.mxu0 %v662
    %890 = vmatmul.bf16.gmra.mxu0 %v208
    %v891 = vpop.f32.mrf.mxu0
    %v892 = vadd.f32 %v878, %v891
    %v893 = vpop.f32.mrf.mxu0
    %v894 = vadd.f32 %v880, %v893
    %895 = vdwg.mxu0
    %896 = vmatpush.bf16.msra.mxu0 %v722
    %897 = vmatpush.bf16.msra.mxu0 %v718
    %898 = vmatpush.bf16.msra.mxu0 %v714
    %899 = vmatpush.bf16.msra.mxu0 %v710
    %900 = vmatpush.bf16.msra.mxu0 %v706
    %901 = vmatpush.bf16.msra.mxu0 %v702
    %902 = vmatpush.bf16.msra.mxu0 %v698
    %903 = vmatpush.bf16.msra.mxu0 %v694
    %904 = vmatmul.bf16.gmra.mxu0 %v209
    %v905 = vpop.f32.mrf.mxu0
    %v906 = vadd.f32 %v892, %v905
    %v907 = vpop.f32.mrf.mxu0
    %v908 = vadd.f32 %v894, %v907
    %909 = vdwg.mxu0
    %910 = vmatpush.bf16.msra.mxu0 %v627
    %911 = vmatpush.bf16.msra.mxu0 %v623
    %912 = vmatpush.bf16.msra.mxu0 %v619
    %913 = vmatpush.bf16.msra.mxu0 %v615
    %914 = vmatpush.bf16.msra.mxu0 %v611
    %915 = vmatpush.bf16.msra.mxu0 %v607
    %916 = vmatpush.bf16.msra.mxu0 %v603
    %917 = vmatpush.bf16.msra.mxu0 %v599
    %918 = vmatmul.bf16.gmra.mxu0 %v206
    %v919 = vpop.f32.mrf.mxu0
    %v920 = vadd.f32 0.0, %v919
    %v921 = vpop.f32.mrf.mxu0
    %v922 = vadd.f32 0.0, %v921
    %923 = vdwg.mxu0
    %924 = vmatpush.bf16.msra.mxu0 %v659
    %925 = vmatpush.bf16.msra.mxu0 %v655
    %926 = vmatpush.bf16.msra.mxu0 %v651
    %927 = vmatpush.bf16.msra.mxu0 %v647
    %928 = vmatpush.bf16.msra.mxu0 %v643
    %929 = vmatpush.bf16.msra.mxu0 %v639
    %930 = vmatpush.bf16.msra.mxu0 %v635
    %931 = vmatpush.bf16.msra.mxu0 %v631
    %932 = vmatmul.bf16.gmra.mxu0 %v207
    %v933 = vpop.f32.mrf.mxu0
    %v934 = vadd.f32 %v920, %v933
    %v935 = vpop.f32.mrf.mxu0
    %v936 = vadd.f32 %v922, %v935
    %937 = vdwg.mxu0
    %938 = vmatpush.bf16.msra.mxu0 %v691
    %939 = vmatpush.bf16.msra.mxu0 %v687
    %940 = vmatpush.bf16.msra.mxu0 %v683
    %941 = vmatpush.bf16.msra.mxu0 %v679
    %942 = vmatpush.bf16.msra.mxu0 %v675
    %943 = vmatpush.bf16.msra.mxu0 %v671
    %944 = vmatpush.bf16.msra.mxu0 %v667
    %945 = vmatpush.bf16.msra.mxu0 %v663
    %946 = vmatmul.bf16.gmra.mxu0 %v208
    %v947 = vpop.f32.mrf.mxu0
    %v948 = vadd.f32 %v934, %v947
    %v949 = vpop.f32.mrf.mxu0
    %v950 = vadd.f32 %v936, %v949
    %951 = vdwg.mxu0
    %952 = vmatpush.bf16.msra.mxu0 %v723
    %953 = vmatpush.bf16.msra.mxu0 %v719
    %954 = vmatpush.bf16.msra.mxu0 %v715
    %955 = vmatpush.bf16.msra.mxu0 %v711
    %956 = vmatpush.bf16.msra.mxu0 %v707
    %957 = vmatpush.bf16.msra.mxu0 %v703
    %958 = vmatpush.bf16.msra.mxu0 %v699
    %959 = vmatpush.bf16.msra.mxu0 %v695
    %960 = vmatmul.bf16.gmra.mxu0 %v209
    %v961 = vpop.f32.mrf.mxu0
    %v962 = vadd.f32 %v948, %v961
    %v963 = vpop.f32.mrf.mxu0
    %v964 = vadd.f32 %v950, %v963
    %965 = vdwg.mxu0
    %966 = vmatpush.bf16.msra.mxu0 %v628
    %967 = vmatpush.bf16.msra.mxu0 %v624
    %968 = vmatpush.bf16.msra.mxu0 %v620
    %969 = vmatpush.bf16.msra.mxu0 %v616
    %970 = vmatpush.bf16.msra.mxu0 %v612
    %971 = vmatpush.bf16.msra.mxu0 %v608
    %972 = vmatpush.bf16.msra.mxu0 %v604
    %973 = vmatpush.bf16.msra.mxu0 %v600
    %974 = vmatmul.bf16.gmra.mxu0 %v206
    %v975 = vpop.f32.mrf.mxu0
    %v976 = vadd.f32 0.0, %v975
    %v977 = vpop.f32.mrf.mxu0
    %v978 = vadd.f32 0.0, %v977
    %979 = vdwg.mxu0
    %980 = vmatpush.bf16.msra.mxu0 %v660
    %981 = vmatpush.bf16.msra.mxu0 %v656
    %982 = vmatpush.bf16.msra.mxu0 %v652
    %983 = vmatpush.bf16.msra.mxu0 %v648
    %984 = vmatpush.bf16.msra.mxu0 %v644
    %985 = vmatpush.bf16.msra.mxu0 %v640
    %986 = vmatpush.bf16.msra.mxu0 %v636
    %987 = vmatpush.bf16.msra.mxu0 %v632
    %988 = vmatmul.bf16.gmra.mxu0 %v207
    %v989 = vpop.f32.mrf.mxu0
    %v990 = vadd.f32 %v976, %v989
    %v991 = vpop.f32.mrf.mxu0
    %v992 = vadd.f32 %v978, %v991
    %993 = vdwg.mxu0
    %994 = vmatpush.bf16.msra.mxu0 %v692
    %995 = vmatpush.bf16.msra.mxu0 %v688
    %996 = vmatpush.bf16.msra.mxu0 %v684
    %997 = vmatpush.bf16.msra.mxu0 %v680
    %998 = vmatpush.bf16.msra.mxu0 %v676
    %999 = vmatpush.bf16.msra.mxu0 %v672
    %1000 = vmatpush.bf16.msra.mxu0 %v668
    %1001 = vmatpush.bf16.msra.mxu0 %v664
    %1002 = vmatmul.bf16.gmra.mxu0 %v208
    %v1003 = vpop.f32.mrf.mxu0
    %v1004 = vadd.f32 %v990, %v1003
    %v1005 = vpop.f32.mrf.mxu0
    %v1006 = vadd.f32 %v992, %v1005
    %1007 = vdwg.mxu0
    %1008 = vmatpush.bf16.msra.mxu0 %v724
    %1009 = vmatpush.bf16.msra.mxu0 %v720
    %1010 = vmatpush.bf16.msra.mxu0 %v716
    %1011 = vmatpush.bf16.msra.mxu0 %v712
    %1012 = vmatpush.bf16.msra.mxu0 %v708
    %1013 = vmatpush.bf16.msra.mxu0 %v704
    %1014 = vmatpush.bf16.msra.mxu0 %v700
    %1015 = vmatpush.bf16.msra.mxu0 %v696
    %1016 = vmatmul.bf16.gmra.mxu0 %v209
    %v1017 = vpop.f32.mrf.mxu0
    %v1018 = vadd.f32 %v1004, %v1017
    %v1019 = vpop.f32.mrf.mxu0
    %v1020 = vadd.f32 %v1006, %v1019
    %1021 = vdwg.mxu0
    %1022 = vmatpush.bf16.msra.mxu0 %v629
    %1023 = vmatpush.bf16.msra.mxu0 %v625
    %1024 = vmatpush.bf16.msra.mxu0 %v621
    %1025 = vmatpush.bf16.msra.mxu0 %v617
    %1026 = vmatpush.bf16.msra.mxu0 %v613
    %1027 = vmatpush.bf16.msra.mxu0 %v609
    %1028 = vmatpush.bf16.msra.mxu0 %v605
    %1029 = vmatpush.bf16.msra.mxu0 %v601
    %1030 = vmatmul.bf16.gmra.mxu0 %v206
    %v1031 = vpop.f32.mrf.mxu0
    %v1032 = vadd.f32 0.0, %v1031
    %v1033 = vpop.f32.mrf.mxu0
    %v1034 = vadd.f32 0.0, %v1033
    %1035 = vdwg.mxu0
    %1036 = vmatpush.bf16.msra.mxu0 %v661
    %1037 = vmatpush.bf16.msra.mxu0 %v657
    %1038 = vmatpush.bf16.msra.mxu0 %v653
    %1039 = vmatpush.bf16.msra.mxu0 %v649
    %1040 = vmatpush.bf16.msra.mxu0 %v645
    %1041 = vmatpush.bf16.msra.mxu0 %v641
    %1042 = vmatpush.bf16.msra.mxu0 %v637
    %1043 = vmatpush.bf16.msra.mxu0 %v633
    %1044 = vmatmul.bf16.gmra.mxu0 %v207
    %v1045 = vpop.f32.mrf.mxu0
    %v1046 = vadd.f32 %v1032, %v1045
    %v1047 = vpop.f32.mrf.mxu0
    %v1048 = vadd.f32 %v1034, %v1047
    %1049 = vdwg.mxu0
    %1050 = vmatpush.bf16.msra.mxu0 %v693
    %1051 = vmatpush.bf16.msra.mxu0 %v689
    %1052 = vmatpush.bf16.msra.mxu0 %v685
    %1053 = vmatpush.bf16.msra.mxu0 %v681
    %1054 = vmatpush.bf16.msra.mxu0 %v677
    %1055 = vmatpush.bf16.msra.mxu0 %v673
    %1056 = vmatpush.bf16.msra.mxu0 %v669
    %1057 = vmatpush.bf16.msra.mxu0 %v665
    %1058 = vmatmul.bf16.gmra.mxu0 %v208
    %v1059 = vpop.f32.mrf.mxu0
    %v1060 = vadd.f32 %v1046, %v1059
    %v1061 = vpop.f32.mrf.mxu0
    %v1062 = vadd.f32 %v1048, %v1061
    %1063 = vdwg.mxu0
    %1064 = vmatpush.bf16.msra.mxu0 %v725
    %1065 = vmatpush.bf16.msra.mxu0 %v721
    %1066 = vmatpush.bf16.msra.mxu0 %v717
    %1067 = vmatpush.bf16.msra.mxu0 %v713
    %1068 = vmatpush.bf16.msra.mxu0 %v709
    %1069 = vmatpush.bf16.msra.mxu0 %v705
    %1070 = vmatpush.bf16.msra.mxu0 %v701
    %1071 = vmatpush.bf16.msra.mxu0 %v697
    %1072 = vmatmul.bf16.gmra.mxu0 %v209
    %v1073 = vpop.f32.mrf.mxu0
    %v1074 = vadd.f32 %v1060, %v1073
    %v1075 = vpop.f32.mrf.mxu0
    %v1076 = vadd.f32 %v1062, %v1075
    %1077 = vdwg.mxu0
    %v1078 = vmax.f32 %v906, %v1018
    %v1079 = vmax.f32 %v962, %v1074
    %v1080 = vmax.f32 %v1078, %v1079
    %1081 = vmax.xlane.f32.xlu0 %v1080
    %v1082 = vpop.xlane.xlu0 %1081
    %v1083 = vmax.f32 %v908, %v1020
    %v1084 = vmax.f32 %v964, %v1076
    %v1085 = vmax.f32 %v1083, %v1084
    %1086 = vmax.xlane.f32.xlu0 %v1085
    %v1087 = vpop.xlane.xlu0 %1086
    %v1088 = vsub.f32 %v906, %v1082
    %v1089 = vsub.f32 %v962, %v1082
    %v1090 = vsub.f32 %v1018, %v1082
    %v1091 = vsub.f32 %v1074, %v1082
    %v1092 = vsub.f32 %v908, %v1087
    %v1093 = vsub.f32 %v964, %v1087
    %v1094 = vsub.f32 %v1020, %v1087
    %v1095 = vsub.f32 %v1076, %v1087
    %v1096 = vmul.f32 %v1088, 1.442695
    %v1097 = vpow.pop %v1096
    %v1098 = vmul.f32 %v1089, 1.442695
    %v1099 = vpow.pop %v1098
    %v1100 = vmul.f32 %v1090, 1.442695
    %v1101 = vpow.pop %v1100
    %v1102 = vmul.f32 %v1091, 1.442695
    %v1103 = vpow.pop %v1102
    %v1104 = vmul.f32 %v1092, 1.442695
    %v1105 = vpow.pop %v1104
    %v1106 = vmul.f32 %v1093, 1.442695
    %v1107 = vpow.pop %v1106
    %v1108 = vmul.f32 %v1094, 1.442695
    %v1109 = vpow.pop %v1108
    %v1110 = vmul.f32 %v1095, 1.442695
    %v1111 = vpow.pop %v1110
    %v1112 = vadd.f32 %v1097, %v1099
    %v1113 = vadd.f32 %v1112, %v1101
    %v1114 = vadd.f32 %v1113, %v1103
    %1115 = vadd.xlane.f32.xlu0 %v1114
    %v1116 = vpop.xlane.xlu0 %1115
    %v1117 = vadd.f32 %v1105, %v1107
    %v1118 = vadd.f32 %v1117, %v1109
    %v1119 = vadd.f32 %v1118, %v1111
    %1120 = vadd.xlane.f32.xlu0 %v1119
    %v1121 = vpop.xlane.xlu0 %1120
    %v1122 = vpack.c.bf16 %v1105, %v1097
    %v1123 = vpack.c.bf16 %v1107, %v1099
    %v1124 = vpack.c.bf16 %v1109, %v1101
    %v1125 = vpack.c.bf16 %v1111, %v1103
    %v1126 = vld [vmem:[#allocation7] sm:$0xff]
    %v1127 = vld [vmem:[#allocation7 + $0x8] sm:$0xff]
    %v1128 = vld [vmem:[#allocation7 + $0x10] sm:$0xff]
    %v1129 = vld [vmem:[#allocation7 + $0x18] sm:$0xff]
    %v1130 = vld [vmem:[#allocation7 + $0x20] sm:$0xff]
    %v1131 = vld [vmem:[#allocation7 + $0x28] sm:$0xff]
    %v1132 = vld [vmem:[#allocation7 + $0x30] sm:$0xff]
    %v1133 = vld [vmem:[#allocation7 + $0x38] sm:$0xff]
    %v1134 = vld [vmem:[#allocation7 + $0x40] sm:$0xff]
    %v1135 = vld [vmem:[#allocation7 + $0x48] sm:$0xff]
    %v1136 = vld [vmem:[#allocation7 + $0x50] sm:$0xff]
    %v1137 = vld [vmem:[#allocation7 + $0x58] sm:$0xff]
    %v1138 = vld [vmem:[#allocation7 + $0x60] sm:$0xff]
    %v1139 = vld [vmem:[#allocation7 + $0x68] sm:$0xff]
    %v1140 = vld [vmem:[#allocation7 + $0x70] sm:$0xff]
    %v1141 = vld [vmem:[#allocation7 + $0x78] sm:$0xff]
    %v1142 = vld [vmem:[#allocation7 + $0x80] sm:$0xff]
    %v1143 = vld [vmem:[#allocation7 + $0x88] sm:$0xff]
    %v1144 = vld [vmem:[#allocation7 + $0x90] sm:$0xff]
    %v1145 = vld [vmem:[#allocation7 + $0x98] sm:$0xff]
    %v1146 = vld [vmem:[#allocation7 + $0xa0] sm:$0xff]
    %v1147 = vld [vmem:[#allocation7 + $0xa8] sm:$0xff]
    %v1148 = vld [vmem:[#allocation7 + $0xb0] sm:$0xff]
    %v1149 = vld [vmem:[#allocation7 + $0xb8] sm:$0xff]
    %v1150 = vld [vmem:[#allocation7 + $0xc0] sm:$0xff]
    %v1151 = vld [vmem:[#allocation7 + $0xc8] sm:$0xff]
    %v1152 = vld [vmem:[#allocation7 + $0xd0] sm:$0xff]
    %v1153 = vld [vmem:[#allocation7 + $0xd8] sm:$0xff]
    %v1154 = vld [vmem:[#allocation7 + $0xe0] sm:$0xff]
    %v1155 = vld [vmem:[#allocation7 + $0xe8] sm:$0xff]
    %v1156 = vld [vmem:[#allocation7 + $0xf0] sm:$0xff]
    %v1157 = vld [vmem:[#allocation7 + $0xf8] sm:$0xff]
    %v1158 = vld [vmem:[#allocation7 + $0x100] sm:$0xff]
    %v1159 = vld [vmem:[#allocation7 + $0x108] sm:$0xff]
    %v1160 = vld [vmem:[#allocation7 + $0x110] sm:$0xff]
    %v1161 = vld [vmem:[#allocation7 + $0x118] sm:$0xff]
    %v1162 = vld [vmem:[#allocation7 + $0x120] sm:$0xff]
    %v1163 = vld [vmem:[#allocation7 + $0x128] sm:$0xff]
    %v1164 = vld [vmem:[#allocation7 + $0x130] sm:$0xff]
    %v1165 = vld [vmem:[#allocation7 + $0x138] sm:$0xff]
    %v1166 = vld [vmem:[#allocation7 + $0x140] sm:$0xff]
    %v1167 = vld [vmem:[#allocation7 + $0x148] sm:$0xff]
    %v1168 = vld [vmem:[#allocation7 + $0x150] sm:$0xff]
    %v1169 = vld [vmem:[#allocation7 + $0x158] sm:$0xff]
    %v1170 = vld [vmem:[#allocation7 + $0x160] sm:$0xff]
    %v1171 = vld [vmem:[#allocation7 + $0x168] sm:$0xff]
    %v1172 = vld [vmem:[#allocation7 + $0x170] sm:$0xff]
    %v1173 = vld [vmem:[#allocation7 + $0x178] sm:$0xff]
    %v1174 = vld [vmem:[#allocation7 + $0x180] sm:$0xff]
    %v1175 = vld [vmem:[#allocation7 + $0x188] sm:$0xff]
    %v1176 = vld [vmem:[#allocation7 + $0x190] sm:$0xff]
    %v1177 = vld [vmem:[#allocation7 + $0x198] sm:$0xff]
    %v1178 = vld [vmem:[#allocation7 + $0x1a0] sm:$0xff]
    %v1179 = vld [vmem:[#allocation7 + $0x1a8] sm:$0xff]
    %v1180 = vld [vmem:[#allocation7 + $0x1b0] sm:$0xff]
    %v1181 = vld [vmem:[#allocation7 + $0x1b8] sm:$0xff]
    %v1182 = vld [vmem:[#allocation7 + $0x1c0] sm:$0xff]
    %v1183 = vld [vmem:[#allocation7 + $0x1c8] sm:$0xff]
    %v1184 = vld [vmem:[#allocation7 + $0x1d0] sm:$0xff]
    %v1185 = vld [vmem:[#allocation7 + $0x1d8] sm:$0xff]
    %v1186 = vld [vmem:[#allocation7 + $0x1e0] sm:$0xff]
    %v1187 = vld [vmem:[#allocation7 + $0x1e8] sm:$0xff]
    %v1188 = vld [vmem:[#allocation7 + $0x1f0] sm:$0xff]
    %v1189 = vld [vmem:[#allocation7 + $0x1f8] sm:$0xff]
    %v1190 = vld [vmem:[#allocation7 + $0x200] sm:$0xff]
    %v1191 = vld [vmem:[#allocation7 + $0x208] sm:$0xff]
    %v1192 = vld [vmem:[#allocation7 + $0x210] sm:$0xff]
    %v1193 = vld [vmem:[#allocation7 + $0x218] sm:$0xff]
    %v1194 = vld [vmem:[#allocation7 + $0x220] sm:$0xff]
    %v1195 = vld [vmem:[#allocation7 + $0x228] sm:$0xff]
    %v1196 = vld [vmem:[#allocation7 + $0x230] sm:$0xff]
    %v1197 = vld [vmem:[#allocation7 + $0x238] sm:$0xff]
    %v1198 = vld [vmem:[#allocation7 + $0x240] sm:$0xff]
    %v1199 = vld [vmem:[#allocation7 + $0x248] sm:$0xff]
    %v1200 = vld [vmem:[#allocation7 + $0x250] sm:$0xff]
    %v1201 = vld [vmem:[#allocation7 + $0x258] sm:$0xff]
    %v1202 = vld [vmem:[#allocation7 + $0x260] sm:$0xff]
    %v1203 = vld [vmem:[#allocation7 + $0x268] sm:$0xff]
    %v1204 = vld [vmem:[#allocation7 + $0x270] sm:$0xff]
    %v1205 = vld [vmem:[#allocation7 + $0x278] sm:$0xff]
    %v1206 = vld [vmem:[#allocation7 + $0x280] sm:$0xff]
    %v1207 = vld [vmem:[#allocation7 + $0x288] sm:$0xff]
    %v1208 = vld [vmem:[#allocation7 + $0x290] sm:$0xff]
    %v1209 = vld [vmem:[#allocation7 + $0x298] sm:$0xff]
    %v1210 = vld [vmem:[#allocation7 + $0x2a0] sm:$0xff]
    %v1211 = vld [vmem:[#allocation7 + $0x2a8] sm:$0xff]
    %v1212 = vld [vmem:[#allocation7 + $0x2b0] sm:$0xff]
    %v1213 = vld [vmem:[#allocation7 + $0x2b8] sm:$0xff]
    %v1214 = vld [vmem:[#allocation7 + $0x2c0] sm:$0xff]
    %v1215 = vld [vmem:[#allocation7 + $0x2c8] sm:$0xff]
    %v1216 = vld [vmem:[#allocation7 + $0x2d0] sm:$0xff]
    %v1217 = vld [vmem:[#allocation7 + $0x2d8] sm:$0xff]
    %v1218 = vld [vmem:[#allocation7 + $0x2e0] sm:$0xff]
    %v1219 = vld [vmem:[#allocation7 + $0x2e8] sm:$0xff]
    %v1220 = vld [vmem:[#allocation7 + $0x2f0] sm:$0xff]
    %v1221 = vld [vmem:[#allocation7 + $0x2f8] sm:$0xff]
    %v1222 = vld [vmem:[#allocation7 + $0x300] sm:$0xff]
    %v1223 = vld [vmem:[#allocation7 + $0x308] sm:$0xff]
    %v1224 = vld [vmem:[#allocation7 + $0x310] sm:$0xff]
    %v1225 = vld [vmem:[#allocation7 + $0x318] sm:$0xff]
    %v1226 = vld [vmem:[#allocation7 + $0x320] sm:$0xff]
    %v1227 = vld [vmem:[#allocation7 + $0x328] sm:$0xff]
    %v1228 = vld [vmem:[#allocation7 + $0x330] sm:$0xff]
    %v1229 = vld [vmem:[#allocation7 + $0x338] sm:$0xff]
    %v1230 = vld [vmem:[#allocation7 + $0x340] sm:$0xff]
    %v1231 = vld [vmem:[#allocation7 + $0x348] sm:$0xff]
    %v1232 = vld [vmem:[#allocation7 + $0x350] sm:$0xff]
    %v1233 = vld [vmem:[#allocation7 + $0x358] sm:$0xff]
    %v1234 = vld [vmem:[#allocation7 + $0x360] sm:$0xff]
    %v1235 = vld [vmem:[#allocation7 + $0x368] sm:$0xff]
    %v1236 = vld [vmem:[#allocation7 + $0x370] sm:$0xff]
    %v1237 = vld [vmem:[#allocation7 + $0x378] sm:$0xff]
    %v1238 = vld [vmem:[#allocation7 + $0x380] sm:$0xff]
    %v1239 = vld [vmem:[#allocation7 + $0x388] sm:$0xff]
    %v1240 = vld [vmem:[#allocation7 + $0x390] sm:$0xff]
    %v1241 = vld [vmem:[#allocation7 + $0x398] sm:$0xff]
    %v1242 = vld [vmem:[#allocation7 + $0x3a0] sm:$0xff]
    %v1243 = vld [vmem:[#allocation7 + $0x3a8] sm:$0xff]
    %v1244 = vld [vmem:[#allocation7 + $0x3b0] sm:$0xff]
    %v1245 = vld [vmem:[#allocation7 + $0x3b8] sm:$0xff]
    %v1246 = vld [vmem:[#allocation7 + $0x3c0] sm:$0xff]
    %v1247 = vld [vmem:[#allocation7 + $0x3c8] sm:$0xff]
    %v1248 = vld [vmem:[#allocation7 + $0x3d0] sm:$0xff]
    %v1249 = vld [vmem:[#allocation7 + $0x3d8] sm:$0xff]
    %v1250 = vld [vmem:[#allocation7 + $0x3e0] sm:$0xff]
    %v1251 = vld [vmem:[#allocation7 + $0x3e8] sm:$0xff]
    %v1252 = vld [vmem:[#allocation7 + $0x3f0] sm:$0xff]
    %v1253 = vld [vmem:[#allocation7 + $0x3f8] sm:$0xff]
    %v1382 = vunpack.c.l.b16 %v1126
    %v1383 = vunpack.c.h.b16 %v1126
    %v1384 = vunpack.c.l.b16 %v1127
    %v1385 = vunpack.c.h.b16 %v1127
    %v1386 = vunpack.c.l.b16 %v1128
    %v1387 = vunpack.c.h.b16 %v1128
    %v1388 = vunpack.c.l.b16 %v1129
    %v1389 = vunpack.c.h.b16 %v1129
    %v1390 = vunpack.c.l.b16 %v1130
    %v1391 = vunpack.c.h.b16 %v1130
    %v1392 = vunpack.c.l.b16 %v1131
    %v1393 = vunpack.c.h.b16 %v1131
    %v1394 = vunpack.c.l.b16 %v1132
    %v1395 = vunpack.c.h.b16 %v1132
    %v1396 = vunpack.c.l.b16 %v1133
    %v1397 = vunpack.c.h.b16 %v1133
    %v1398 = vunpack.c.l.b16 %v1134
    %v1399 = vunpack.c.h.b16 %v1134
    %v1400 = vunpack.c.l.b16 %v1135
    %v1401 = vunpack.c.h.b16 %v1135
    %v1402 = vunpack.c.l.b16 %v1136
    %v1403 = vunpack.c.h.b16 %v1136
    %v1404 = vunpack.c.l.b16 %v1137
    %v1405 = vunpack.c.h.b16 %v1137
    %v1406 = vunpack.c.l.b16 %v1138
    %v1407 = vunpack.c.h.b16 %v1138
    %v1408 = vunpack.c.l.b16 %v1139
    %v1409 = vunpack.c.h.b16 %v1139
    %v1410 = vunpack.c.l.b16 %v1140
    %v1411 = vunpack.c.h.b16 %v1140
    %v1412 = vunpack.c.l.b16 %v1141
    %v1413 = vunpack.c.h.b16 %v1141
    %v1414 = vunpack.c.l.b16 %v1142
    %v1415 = vunpack.c.h.b16 %v1142
    %v1416 = vunpack.c.l.b16 %v1143
    %v1417 = vunpack.c.h.b16 %v1143
    %v1418 = vunpack.c.l.b16 %v1144
    %v1419 = vunpack.c.h.b16 %v1144
    %v1420 = vunpack.c.l.b16 %v1145
    %v1421 = vunpack.c.h.b16 %v1145
    %v1422 = vunpack.c.l.b16 %v1146
    %v1423 = vunpack.c.h.b16 %v1146
    %v1424 = vunpack.c.l.b16 %v1147
    %v1425 = vunpack.c.h.b16 %v1147
    %v1426 = vunpack.c.l.b16 %v1148
    %v1427 = vunpack.c.h.b16 %v1148
    %v1428 = vunpack.c.l.b16 %v1149
    %v1429 = vunpack.c.h.b16 %v1149
    %v1430 = vunpack.c.l.b16 %v1150
    %v1431 = vunpack.c.h.b16 %v1150
    %v1432 = vunpack.c.l.b16 %v1151
    %v1433 = vunpack.c.h.b16 %v1151
    %v1434 = vunpack.c.l.b16 %v1152
    %v1435 = vunpack.c.h.b16 %v1152
    %v1436 = vunpack.c.l.b16 %v1153
    %v1437 = vunpack.c.h.b16 %v1153
    %v1438 = vunpack.c.l.b16 %v1154
    %v1439 = vunpack.c.h.b16 %v1154
    %v1440 = vunpack.c.l.b16 %v1155
    %v1441 = vunpack.c.h.b16 %v1155
    %v1442 = vunpack.c.l.b16 %v1156
    %v1443 = vunpack.c.h.b16 %v1156
    %v1444 = vunpack.c.l.b16 %v1157
    %v1445 = vunpack.c.h.b16 %v1157
    %v1446 = vunpack.c.l.b16 %v1158
    %v1447 = vunpack.c.h.b16 %v1158
    %v1448 = vunpack.c.l.b16 %v1159
    %v1449 = vunpack.c.h.b16 %v1159
    %v1450 = vunpack.c.l.b16 %v1160
    %v1451 = vunpack.c.h.b16 %v1160
    %v1452 = vunpack.c.l.b16 %v1161
    %v1453 = vunpack.c.h.b16 %v1161
    %v1454 = vunpack.c.l.b16 %v1162
    %v1455 = vunpack.c.h.b16 %v1162
    %v1456 = vunpack.c.l.b16 %v1163
    %v1457 = vunpack.c.h.b16 %v1163
    %v1458 = vunpack.c.l.b16 %v1164
    %v1459 = vunpack.c.h.b16 %v1164
    %v1460 = vunpack.c.l.b16 %v1165
    %v1461 = vunpack.c.h.b16 %v1165
    %v1462 = vunpack.c.l.b16 %v1166
    %v1463 = vunpack.c.h.b16 %v1166
    %v1464 = vunpack.c.l.b16 %v1167
    %v1465 = vunpack.c.h.b16 %v1167
    %v1466 = vunpack.c.l.b16 %v1168
    %v1467 = vunpack.c.h.b16 %v1168
    %v1468 = vunpack.c.l.b16 %v1169
    %v1469 = vunpack.c.h.b16 %v1169
    %v1470 = vunpack.c.l.b16 %v1170
    %v1471 = vunpack.c.h.b16 %v1170
    %v1472 = vunpack.c.l.b16 %v1171
    %v1473 = vunpack.c.h.b16 %v1171
    %v1474 = vunpack.c.l.b16 %v1172
    %v1475 = vunpack.c.h.b16 %v1172
    %v1476 = vunpack.c.l.b16 %v1173
    %v1477 = vunpack.c.h.b16 %v1173
    %v1478 = vunpack.c.l.b16 %v1174
    %v1479 = vunpack.c.h.b16 %v1174
    %v1480 = vunpack.c.l.b16 %v1175
    %v1481 = vunpack.c.h.b16 %v1175
    %v1482 = vunpack.c.l.b16 %v1176
    %v1483 = vunpack.c.h.b16 %v1176
    %v1484 = vunpack.c.l.b16 %v1177
    %v1485 = vunpack.c.h.b16 %v1177
    %v1486 = vunpack.c.l.b16 %v1178
    %v1487 = vunpack.c.h.b16 %v1178
    %v1488 = vunpack.c.l.b16 %v1179
    %v1489 = vunpack.c.h.b16 %v1179
    %v1490 = vunpack.c.l.b16 %v1180
    %v1491 = vunpack.c.h.b16 %v1180
    %v1492 = vunpack.c.l.b16 %v1181
    %v1493 = vunpack.c.h.b16 %v1181
    %v1494 = vunpack.c.l.b16 %v1182
    %v1495 = vunpack.c.h.b16 %v1182
    %v1496 = vunpack.c.l.b16 %v1183
    %v1497 = vunpack.c.h.b16 %v1183
    %v1498 = vunpack.c.l.b16 %v1184
    %v1499 = vunpack.c.h.b16 %v1184
    %v1500 = vunpack.c.l.b16 %v1185
    %v1501 = vunpack.c.h.b16 %v1185
    %v1502 = vunpack.c.l.b16 %v1186
    %v1503 = vunpack.c.h.b16 %v1186
    %v1504 = vunpack.c.l.b16 %v1187
    %v1505 = vunpack.c.h.b16 %v1187
    %v1506 = vunpack.c.l.b16 %v1188
    %v1507 = vunpack.c.h.b16 %v1188
    %v1508 = vunpack.c.l.b16 %v1189
    %v1509 = vunpack.c.h.b16 %v1189
    %v1510 = vunpack.c.l.b16 %v1190
    %v1511 = vunpack.c.h.b16 %v1190
    %v1512 = vunpack.c.l.b16 %v1191
    %v1513 = vunpack.c.h.b16 %v1191
    %v1514 = vunpack.c.l.b16 %v1192
    %v1515 = vunpack.c.h.b16 %v1192
    %v1516 = vunpack.c.l.b16 %v1193
    %v1517 = vunpack.c.h.b16 %v1193
    %v1518 = vunpack.c.l.b16 %v1194
    %v1519 = vunpack.c.h.b16 %v1194
    %v1520 = vunpack.c.l.b16 %v1195
    %v1521 = vunpack.c.h.b16 %v1195
    %v1522 = vunpack.c.l.b16 %v1196
    %v1523 = vunpack.c.h.b16 %v1196
    %v1524 = vunpack.c.l.b16 %v1197
    %v1525 = vunpack.c.h.b16 %v1197
    %v1526 = vunpack.c.l.b16 %v1198
    %v1527 = vunpack.c.h.b16 %v1198
    %v1528 = vunpack.c.l.b16 %v1199
    %v1529 = vunpack.c.h.b16 %v1199
    %v1530 = vunpack.c.l.b16 %v1200
    %v1531 = vunpack.c.h.b16 %v1200
    %v1532 = vunpack.c.l.b16 %v1201
    %v1533 = vunpack.c.h.b16 %v1201
    %v1534 = vunpack.c.l.b16 %v1202
    %v1535 = vunpack.c.h.b16 %v1202
    %v1536 = vunpack.c.l.b16 %v1203
    %v1537 = vunpack.c.h.b16 %v1203
    %v1538 = vunpack.c.l.b16 %v1204
    %v1539 = vunpack.c.h.b16 %v1204
    %v1540 = vunpack.c.l.b16 %v1205
    %v1541 = vunpack.c.h.b16 %v1205
    %v1542 = vunpack.c.l.b16 %v1206
    %v1543 = vunpack.c.h.b16 %v1206
    %v1544 = vunpack.c.l.b16 %v1207
    %v1545 = vunpack.c.h.b16 %v1207
    %v1546 = vunpack.c.l.b16 %v1208
    %v1547 = vunpack.c.h.b16 %v1208
    %v1548 = vunpack.c.l.b16 %v1209
    %v1549 = vunpack.c.h.b16 %v1209
    %v1550 = vunpack.c.l.b16 %v1210
    %v1551 = vunpack.c.h.b16 %v1210
    %v1552 = vunpack.c.l.b16 %v1211
    %v1553 = vunpack.c.h.b16 %v1211
    %v1554 = vunpack.c.l.b16 %v1212
    %v1555 = vunpack.c.h.b16 %v1212
    %v1556 = vunpack.c.l.b16 %v1213
    %v1557 = vunpack.c.h.b16 %v1213
    %v1558 = vunpack.c.l.b16 %v1214
    %v1559 = vunpack.c.h.b16 %v1214
    %v1560 = vunpack.c.l.b16 %v1215
    %v1561 = vunpack.c.h.b16 %v1215
    %v1562 = vunpack.c.l.b16 %v1216
    %v1563 = vunpack.c.h.b16 %v1216
    %v1564 = vunpack.c.l.b16 %v1217
    %v1565 = vunpack.c.h.b16 %v1217
    %v1566 = vunpack.c.l.b16 %v1218
    %v1567 = vunpack.c.h.b16 %v1218
    %v1568 = vunpack.c.l.b16 %v1219
    %v1569 = vunpack.c.h.b16 %v1219
    %v1570 = vunpack.c.l.b16 %v1220
    %v1571 = vunpack.c.h.b16 %v1220
    %v1572 = vunpack.c.l.b16 %v1221
    %v1573 = vunpack.c.h.b16 %v1221
    %v1574 = vunpack.c.l.b16 %v1222
    %v1575 = vunpack.c.h.b16 %v1222
    %v1576 = vunpack.c.l.b16 %v1223
    %v1577 = vunpack.c.h.b16 %v1223
    %v1578 = vunpack.c.l.b16 %v1224
    %v1579 = vunpack.c.h.b16 %v1224
    %v1580 = vunpack.c.l.b16 %v1225
    %v1581 = vunpack.c.h.b16 %v1225
    %v1582 = vunpack.c.l.b16 %v1226
    %v1583 = vunpack.c.h.b16 %v1226
    %v1584 = vunpack.c.l.b16 %v1227
    %v1585 = vunpack.c.h.b16 %v1227
    %v1586 = vunpack.c.l.b16 %v1228
    %v1587 = vunpack.c.h.b16 %v1228
    %v1588 = vunpack.c.l.b16 %v1229
    %v1589 = vunpack.c.h.b16 %v1229
    %v1590 = vunpack.c.l.b16 %v1230
    %v1591 = vunpack.c.h.b16 %v1230
    %v1592 = vunpack.c.l.b16 %v1231
    %v1593 = vunpack.c.h.b16 %v1231
    %v1594 = vunpack.c.l.b16 %v1232
    %v1595 = vunpack.c.h.b16 %v1232
    %v1596 = vunpack.c.l.b16 %v1233
    %v1597 = vunpack.c.h.b16 %v1233
    %v1598 = vunpack.c.l.b16 %v1234
    %v1599 = vunpack.c.h.b16 %v1234
    %v1600 = vunpack.c.l.b16 %v1235
    %v1601 = vunpack.c.h.b16 %v1235
    %v1602 = vunpack.c.l.b16 %v1236
    %v1603 = vunpack.c.h.b16 %v1236
    %v1604 = vunpack.c.l.b16 %v1237
    %v1605 = vunpack.c.h.b16 %v1237
    %v1606 = vunpack.c.l.b16 %v1238
    %v1607 = vunpack.c.h.b16 %v1238
    %v1608 = vunpack.c.l.b16 %v1239
    %v1609 = vunpack.c.h.b16 %v1239
    %v1610 = vunpack.c.l.b16 %v1240
    %v1611 = vunpack.c.h.b16 %v1240
    %v1612 = vunpack.c.l.b16 %v1241
    %v1613 = vunpack.c.h.b16 %v1241
    %v1614 = vunpack.c.l.b16 %v1242
    %v1615 = vunpack.c.h.b16 %v1242
    %v1616 = vunpack.c.l.b16 %v1243
    %v1617 = vunpack.c.h.b16 %v1243
    %v1618 = vunpack.c.l.b16 %v1244
    %v1619 = vunpack.c.h.b16 %v1244
    %v1620 = vunpack.c.l.b16 %v1245
    %v1621 = vunpack.c.h.b16 %v1245
    %v1622 = vunpack.c.l.b16 %v1246
    %v1623 = vunpack.c.h.b16 %v1246
    %v1624 = vunpack.c.l.b16 %v1247
    %v1625 = vunpack.c.h.b16 %v1247
    %v1626 = vunpack.c.l.b16 %v1248
    %v1627 = vunpack.c.h.b16 %v1248
    %v1628 = vunpack.c.l.b16 %v1249
    %v1629 = vunpack.c.h.b16 %v1249
    %v1630 = vunpack.c.l.b16 %v1250
    %v1631 = vunpack.c.h.b16 %v1250
    %v1632 = vunpack.c.l.b16 %v1251
    %v1633 = vunpack.c.h.b16 %v1251
    %v1634 = vunpack.c.l.b16 %v1252
    %v1635 = vunpack.c.h.b16 %v1252
    %v1636 = vunpack.c.l.b16 %v1253
    %v1637 = vunpack.c.h.b16 %v1253
    %v1638 = vpack.c.b16 %v1386, %v1382
    %v1639 = vpack.c.b16 %v1387, %v1383
    %v1640 = vpack.c.b16 %v1388, %v1384
    %v1641 = vpack.c.b16 %v1389, %v1385
    %v1642 = vpack.c.b16 %v1394, %v1390
    %v1643 = vpack.c.b16 %v1395, %v1391
    %v1644 = vpack.c.b16 %v1396, %v1392
    %v1645 = vpack.c.b16 %v1397, %v1393
    %v1646 = vpack.c.b16 %v1402, %v1398
    %v1647 = vpack.c.b16 %v1403, %v1399
    %v1648 = vpack.c.b16 %v1404, %v1400
    %v1649 = vpack.c.b16 %v1405, %v1401
    %v1650 = vpack.c.b16 %v1410, %v1406
    %v1651 = vpack.c.b16 %v1411, %v1407
    %v1652 = vpack.c.b16 %v1412, %v1408
    %v1653 = vpack.c.b16 %v1413, %v1409
    %v1654 = vpack.c.b16 %v1418, %v1414
    %v1655 = vpack.c.b16 %v1419, %v1415
    %v1656 = vpack.c.b16 %v1420, %v1416
    %v1657 = vpack.c.b16 %v1421, %v1417
    %v1658 = vpack.c.b16 %v1426, %v1422
    %v1659 = vpack.c.b16 %v1427, %v1423
    %v1660 = vpack.c.b16 %v1428, %v1424
    %v1661 = vpack.c.b16 %v1429, %v1425
    %v1662 = vpack.c.b16 %v1434, %v1430
    %v1663 = vpack.c.b16 %v1435, %v1431
    %v1664 = vpack.c.b16 %v1436, %v1432
    %v1665 = vpack.c.b16 %v1437, %v1433
    %v1666 = vpack.c.b16 %v1442, %v1438
    %v1667 = vpack.c.b16 %v1443, %v1439
    %v1668 = vpack.c.b16 %v1444, %v1440
    %v1669 = vpack.c.b16 %v1445, %v1441
    %v1670 = vpack.c.b16 %v1450, %v1446
    %v1671 = vpack.c.b16 %v1451, %v1447
    %v1672 = vpack.c.b16 %v1452, %v1448
    %v1673 = vpack.c.b16 %v1453, %v1449
    %v1674 = vpack.c.b16 %v1458, %v1454
    %v1675 = vpack.c.b16 %v1459, %v1455
    %v1676 = vpack.c.b16 %v1460, %v1456
    %v1677 = vpack.c.b16 %v1461, %v1457
    %v1678 = vpack.c.b16 %v1466, %v1462
    %v1679 = vpack.c.b16 %v1467, %v1463
    %v1680 = vpack.c.b16 %v1468, %v1464
    %v1681 = vpack.c.b16 %v1469, %v1465
    %v1682 = vpack.c.b16 %v1474, %v1470
    %v1683 = vpack.c.b16 %v1475, %v1471
    %v1684 = vpack.c.b16 %v1476, %v1472
    %v1685 = vpack.c.b16 %v1477, %v1473
    %v1686 = vpack.c.b16 %v1482, %v1478
    %v1687 = vpack.c.b16 %v1483, %v1479
    %v1688 = vpack.c.b16 %v1484, %v1480
    %v1689 = vpack.c.b16 %v1485, %v1481
    %v1690 = vpack.c.b16 %v1490, %v1486
    %v1691 = vpack.c.b16 %v1491, %v1487
    %v1692 = vpack.c.b16 %v1492, %v1488
    %v1693 = vpack.c.b16 %v1493, %v1489
    %v1694 = vpack.c.b16 %v1498, %v1494
    %v1695 = vpack.c.b16 %v1499, %v1495
    %v1696 = vpack.c.b16 %v1500, %v1496
    %v1697 = vpack.c.b16 %v1501, %v1497
    %v1698 = vpack.c.b16 %v1506, %v1502
    %v1699 = vpack.c.b16 %v1507, %v1503
    %v1700 = vpack.c.b16 %v1508, %v1504
    %v1701 = vpack.c.b16 %v1509, %v1505
    %v1702 = vpack.c.b16 %v1514, %v1510
    %v1703 = vpack.c.b16 %v1515, %v1511
    %v1704 = vpack.c.b16 %v1516, %v1512
    %v1705 = vpack.c.b16 %v1517, %v1513
    %v1706 = vpack.c.b16 %v1522, %v1518
    %v1707 = vpack.c.b16 %v1523, %v1519
    %v1708 = vpack.c.b16 %v1524, %v1520
    %v1709 = vpack.c.b16 %v1525, %v1521
    %v1710 = vpack.c.b16 %v1530, %v1526
    %v1711 = vpack.c.b16 %v1531, %v1527
    %v1712 = vpack.c.b16 %v1532, %v1528
    %v1713 = vpack.c.b16 %v1533, %v1529
    %v1714 = vpack.c.b16 %v1538, %v1534
    %v1715 = vpack.c.b16 %v1539, %v1535
    %v1716 = vpack.c.b16 %v1540, %v1536
    %v1717 = vpack.c.b16 %v1541, %v1537
    %v1718 = vpack.c.b16 %v1546, %v1542
    %v1719 = vpack.c.b16 %v1547, %v1543
    %v1720 = vpack.c.b16 %v1548, %v1544
    %v1721 = vpack.c.b16 %v1549, %v1545
    %v1722 = vpack.c.b16 %v1554, %v1550
    %v1723 = vpack.c.b16 %v1555, %v1551
    %v1724 = vpack.c.b16 %v1556, %v1552
    %v1725 = vpack.c.b16 %v1557, %v1553
    %v1726 = vpack.c.b16 %v1562, %v1558
    %v1727 = vpack.c.b16 %v1563, %v1559
    %v1728 = vpack.c.b16 %v1564, %v1560
    %v1729 = vpack.c.b16 %v1565, %v1561
    %v1730 = vpack.c.b16 %v1570, %v1566
    %v1731 = vpack.c.b16 %v1571, %v1567
    %v1732 = vpack.c.b16 %v1572, %v1568
    %v1733 = vpack.c.b16 %v1573, %v1569
    %v1734 = vpack.c.b16 %v1578, %v1574
    %v1735 = vpack.c.b16 %v1579, %v1575
    %v1736 = vpack.c.b16 %v1580, %v1576
    %v1737 = vpack.c.b16 %v1581, %v1577
    %v1738 = vpack.c.b16 %v1586, %v1582
    %v1739 = vpack.c.b16 %v1587, %v1583
    %v1740 = vpack.c.b16 %v1588, %v1584
    %v1741 = vpack.c.b16 %v1589, %v1585
    %v1742 = vpack.c.b16 %v1594, %v1590
    %v1743 = vpack.c.b16 %v1595, %v1591
    %v1744 = vpack.c.b16 %v1596, %v1592
    %v1745 = vpack.c.b16 %v1597, %v1593
    %v1746 = vpack.c.b16 %v1602, %v1598
    %v1747 = vpack.c.b16 %v1603, %v1599
    %v1748 = vpack.c.b16 %v1604, %v1600
    %v1749 = vpack.c.b16 %v1605, %v1601
    %v1750 = vpack.c.b16 %v1610, %v1606
    %v1751 = vpack.c.b16 %v1611, %v1607
    %v1752 = vpack.c.b16 %v1612, %v1608
    %v1753 = vpack.c.b16 %v1613, %v1609
    %v1754 = vpack.c.b16 %v1618, %v1614
    %v1755 = vpack.c.b16 %v1619, %v1615
    %v1756 = vpack.c.b16 %v1620, %v1616
    %v1757 = vpack.c.b16 %v1621, %v1617
    %v1758 = vpack.c.b16 %v1626, %v1622
    %v1759 = vpack.c.b16 %v1627, %v1623
    %v1760 = vpack.c.b16 %v1628, %v1624
    %v1761 = vpack.c.b16 %v1629, %v1625
    %v1762 = vpack.c.b16 %v1634, %v1630
    %v1763 = vpack.c.b16 %v1635, %v1631
    %v1764 = vpack.c.b16 %v1636, %v1632
    %v1765 = vpack.c.b16 %v1637, %v1633
    %1894 = vmatpush.bf16.msra.mxu0 %v1666
    %1895 = vmatpush.bf16.msra.mxu0 %v1662
    %1896 = vmatpush.bf16.msra.mxu0 %v1658
    %1897 = vmatpush.bf16.msra.mxu0 %v1654
    %1898 = vmatpush.bf16.msra.mxu0 %v1650
    %1899 = vmatpush.bf16.msra.mxu0 %v1646
    %1900 = vmatpush.bf16.msra.mxu0 %v1642
    %1901 = vmatpush.bf16.msra.mxu0 %v1638
    %1902 = vmatmul.bf16.gmra.mxu0 %v1122
    %v1903 = vpop.f32.mrf.mxu0
    %v1904 = vadd.f32 0.0, %v1903
    %v1905 = vpop.f32.mrf.mxu0
    %v1906 = vadd.f32 0.0, %v1905
    %1907 = vdwg.mxu0
    %1908 = vmatpush.bf16.msra.mxu0 %v1698
    %1909 = vmatpush.bf16.msra.mxu0 %v1694
    %1910 = vmatpush.bf16.msra.mxu0 %v1690
    %1911 = vmatpush.bf16.msra.mxu0 %v1686
    %1912 = vmatpush.bf16.msra.mxu0 %v1682
    %1913 = vmatpush.bf16.msra.mxu0 %v1678
    %1914 = vmatpush.bf16.msra.mxu0 %v1674
    %1915 = vmatpush.bf16.msra.mxu0 %v1670
    %1916 = vmatmul.bf16.gmra.mxu0 %v1123
    %v1917 = vpop.f32.mrf.mxu0
    %v1918 = vadd.f32 %v1904, %v1917
    %v1919 = vpop.f32.mrf.mxu0
    %v1920 = vadd.f32 %v1906, %v1919
    %1921 = vdwg.mxu0
    %1922 = vmatpush.bf16.msra.mxu0 %v1730
    %1923 = vmatpush.bf16.msra.mxu0 %v1726
    %1924 = vmatpush.bf16.msra.mxu0 %v1722
    %1925 = vmatpush.bf16.msra.mxu0 %v1718
    %1926 = vmatpush.bf16.msra.mxu0 %v1714
    %1927 = vmatpush.bf16.msra.mxu0 %v1710
    %1928 = vmatpush.bf16.msra.mxu0 %v1706
    %1929 = vmatpush.bf16.msra.mxu0 %v1702
    %1930 = vmatmul.bf16.gmra.mxu0 %v1124
    %v1931 = vpop.f32.mrf.mxu0
    %v1932 = vadd.f32 %v1918, %v1931
    %v1933 = vpop.f32.mrf.mxu0
    %v1934 = vadd.f32 %v1920, %v1933
    %1935 = vdwg.mxu0
    %1936 = vmatpush.bf16.msra.mxu0 %v1762
    %1937 = vmatpush.bf16.msra.mxu0 %v1758
    %1938 = vmatpush.bf16.msra.mxu0 %v1754
    %1939 = vmatpush.bf16.msra.mxu0 %v1750
    %1940 = vmatpush.bf16.msra.mxu0 %v1746
    %1941 = vmatpush.bf16.msra.mxu0 %v1742
    %1942 = vmatpush.bf16.msra.mxu0 %v1738
    %1943 = vmatpush.bf16.msra.mxu0 %v1734
    %1944 = vmatmul.bf16.gmra.mxu0 %v1125
    %v1945 = vpop.f32.mrf.mxu0
    %v1946 = vadd.f32 %v1932, %v1945
    %v1947 = vpop.f32.mrf.mxu0
    %v1948 = vadd.f32 %v1934, %v1947
    %1949 = vdwg.mxu0
    %1950 = vmatpush.bf16.msra.mxu0 %v1667
    %1951 = vmatpush.bf16.msra.mxu0 %v1663
    %1952 = vmatpush.bf16.msra.mxu0 %v1659
    %1953 = vmatpush.bf16.msra.mxu0 %v1655
    %1954 = vmatpush.bf16.msra.mxu0 %v1651
    %1955 = vmatpush.bf16.msra.mxu0 %v1647
    %1956 = vmatpush.bf16.msra.mxu0 %v1643
    %1957 = vmatpush.bf16.msra.mxu0 %v1639
    %1958 = vmatmul.bf16.gmra.mxu0 %v1122
    %v1959 = vpop.f32.mrf.mxu0
    %v1960 = vadd.f32 0.0, %v1959
    %v1961 = vpop.f32.mrf.mxu0
    %v1962 = vadd.f32 0.0, %v1961
    %1963 = vdwg.mxu0
    %1964 = vmatpush.bf16.msra.mxu0 %v1699
    %1965 = vmatpush.bf16.msra.mxu0 %v1695
    %1966 = vmatpush.bf16.msra.mxu0 %v1691
    %1967 = vmatpush.bf16.msra.mxu0 %v1687
    %1968 = vmatpush.bf16.msra.mxu0 %v1683
    %1969 = vmatpush.bf16.msra.mxu0 %v1679
    %1970 = vmatpush.bf16.msra.mxu0 %v1675
    %1971 = vmatpush.bf16.msra.mxu0 %v1671
    %1972 = vmatmul.bf16.gmra.mxu0 %v1123
    %v1973 = vpop.f32.mrf.mxu0
    %v1974 = vadd.f32 %v1960, %v1973
    %v1975 = vpop.f32.mrf.mxu0
    %v1976 = vadd.f32 %v1962, %v1975
    %1977 = vdwg.mxu0
    %1978 = vmatpush.bf16.msra.mxu0 %v1731
    %1979 = vmatpush.bf16.msra.mxu0 %v1727
    %1980 = vmatpush.bf16.msra.mxu0 %v1723
    %1981 = vmatpush.bf16.msra.mxu0 %v1719
    %1982 = vmatpush.bf16.msra.mxu0 %v1715
    %1983 = vmatpush.bf16.msra.mxu0 %v1711
    %1984 = vmatpush.bf16.msra.mxu0 %v1707
    %1985 = vmatpush.bf16.msra.mxu0 %v1703
    %1986 = vmatmul.bf16.gmra.mxu0 %v1124
    %v1987 = vpop.f32.mrf.mxu0
    %v1988 = vadd.f32 %v1974, %v1987
    %v1989 = vpop.f32.mrf.mxu0
    %v1990 = vadd.f32 %v1976, %v1989
    %1991 = vdwg.mxu0
    %1992 = vmatpush.bf16.msra.mxu0 %v1763
    %1993 = vmatpush.bf16.msra.mxu0 %v1759
    %1994 = vmatpush.bf16.msra.mxu0 %v1755
    %1995 = vmatpush.bf16.msra.mxu0 %v1751
    %1996 = vmatpush.bf16.msra.mxu0 %v1747
    %1997 = vmatpush.bf16.msra.mxu0 %v1743
    %1998 = vmatpush.bf16.msra.mxu0 %v1739
    %1999 = vmatpush.bf16.msra.mxu0 %v1735
    %2000 = vmatmul.bf16.gmra.mxu0 %v1125
    %v2001 = vpop.f32.mrf.mxu0
    %v2002 = vadd.f32 %v1988, %v2001
    %v2003 = vpop.f32.mrf.mxu0
    %v2004 = vadd.f32 %v1990, %v2003
    %2005 = vdwg.mxu0
    %2006 = vmatpush.bf16.msra.mxu0 %v1668
    %2007 = vmatpush.bf16.msra.mxu0 %v1664
    %2008 = vmatpush.bf16.msra.mxu0 %v1660
    %2009 = vmatpush.bf16.msra.mxu0 %v1656
    %2010 = vmatpush.bf16.msra.mxu0 %v1652
    %2011 = vmatpush.bf16.msra.mxu0 %v1648
    %2012 = vmatpush.bf16.msra.mxu0 %v1644
    %2013 = vmatpush.bf16.msra.mxu0 %v1640
    %2014 = vmatmul.bf16.gmra.mxu0 %v1122
    %v2015 = vpop.f32.mrf.mxu0
    %v2016 = vadd.f32 0.0, %v2015
    %v2017 = vpop.f32.mrf.mxu0
    %v2018 = vadd.f32 0.0, %v2017
    %2019 = vdwg.mxu0
    %2020 = vmatpush.bf16.msra.mxu0 %v1700
    %2021 = vmatpush.bf16.msra.mxu0 %v1696
    %2022 = vmatpush.bf16.msra.mxu0 %v1692
    %2023 = vmatpush.bf16.msra.mxu0 %v1688
    %2024 = vmatpush.bf16.msra.mxu0 %v1684
    %2025 = vmatpush.bf16.msra.mxu0 %v1680
    %2026 = vmatpush.bf16.msra.mxu0 %v1676
    %2027 = vmatpush.bf16.msra.mxu0 %v1672
    %2028 = vmatmul.bf16.gmra.mxu0 %v1123
    %v2029 = vpop.f32.mrf.mxu0
    %v2030 = vadd.f32 %v2016, %v2029
    %v2031 = vpop.f32.mrf.mxu0
    %v2032 = vadd.f32 %v2018, %v2031
    %2033 = vdwg.mxu0
    %2034 = vmatpush.bf16.msra.mxu0 %v1732
    %2035 = vmatpush.bf16.msra.mxu0 %v1728
    %2036 = vmatpush.bf16.msra.mxu0 %v1724
    %2037 = vmatpush.bf16.msra.mxu0 %v1720
    %2038 = vmatpush.bf16.msra.mxu0 %v1716
    %2039 = vmatpush.bf16.msra.mxu0 %v1712
    %2040 = vmatpush.bf16.msra.mxu0 %v1708
    %2041 = vmatpush.bf16.msra.mxu0 %v1704
    %2042 = vmatmul.bf16.gmra.mxu0 %v1124
    %v2043 = vpop.f32.mrf.mxu0
    %v2044 = vadd.f32 %v2030, %v2043
    %v2045 = vpop.f32.mrf.mxu0
    %v2046 = vadd.f32 %v2032, %v2045
    %2047 = vdwg.mxu0
    %2048 = vmatpush.bf16.msra.mxu0 %v1764
    %2049 = vmatpush.bf16.msra.mxu0 %v1760
    %2050 = vmatpush.bf16.msra.mxu0 %v1756
    %2051 = vmatpush.bf16.msra.mxu0 %v1752
    %2052 = vmatpush.bf16.msra.mxu0 %v1748
    %2053 = vmatpush.bf16.msra.mxu0 %v1744
    %2054 = vmatpush.bf16.msra.mxu0 %v1740
    %2055 = vmatpush.bf16.msra.mxu0 %v1736
    %2056 = vmatmul.bf16.gmra.mxu0 %v1125
    %v2057 = vpop.f32.mrf.mxu0
    %v2058 = vadd.f32 %v2044, %v2057
    %v2059 = vpop.f32.mrf.mxu0
    %v2060 = vadd.f32 %v2046, %v2059
    %2061 = vdwg.mxu0
    %2062 = vmatpush.bf16.msra.mxu0 %v1669
    %2063 = vmatpush.bf16.msra.mxu0 %v1665
    %2064 = vmatpush.bf16.msra.mxu0 %v1661
    %2065 = vmatpush.bf16.msra.mxu0 %v1657
    %2066 = vmatpush.bf16.msra.mxu0 %v1653
    %2067 = vmatpush.bf16.msra.mxu0 %v1649
    %2068 = vmatpush.bf16.msra.mxu0 %v1645
    %2069 = vmatpush.bf16.msra.mxu0 %v1641
    %2070 = vmatmul.bf16.gmra.mxu0 %v1122
    %v2071 = vpop.f32.mrf.mxu0
    %v2072 = vadd.f32 0.0, %v2071
    %v2073 = vpop.f32.mrf.mxu0
    %v2074 = vadd.f32 0.0, %v2073
    %2075 = vdwg.mxu0
    %2076 = vmatpush.bf16.msra.mxu0 %v1701
    %2077 = vmatpush.bf16.msra.mxu0 %v1697
    %2078 = vmatpush.bf16.msra.mxu0 %v1693
    %2079 = vmatpush.bf16.msra.mxu0 %v1689
    %2080 = vmatpush.bf16.msra.mxu0 %v1685
    %2081 = vmatpush.bf16.msra.mxu0 %v1681
    %2082 = vmatpush.bf16.msra.mxu0 %v1677
    %2083 = vmatpush.bf16.msra.mxu0 %v1673
    %2084 = vmatmul.bf16.gmra.mxu0 %v1123
    %v2085 = vpop.f32.mrf.mxu0
    %v2086 = vadd.f32 %v2072, %v2085
    %v2087 = vpop.f32.mrf.mxu0
    %v2088 = vadd.f32 %v2074, %v2087
    %2089 = vdwg.mxu0
    %2090 = vmatpush.bf16.msra.mxu0 %v1733
    %2091 = vmatpush.bf16.msra.mxu0 %v1729
    %2092 = vmatpush.bf16.msra.mxu0 %v1725
    %2093 = vmatpush.bf16.msra.mxu0 %v1721
    %2094 = vmatpush.bf16.msra.mxu0 %v1717
    %2095 = vmatpush.bf16.msra.mxu0 %v1713
    %2096 = vmatpush.bf16.msra.mxu0 %v1709
    %2097 = vmatpush.bf16.msra.mxu0 %v1705
    %2098 = vmatmul.bf16.gmra.mxu0 %v1124
    %v2099 = vpop.f32.mrf.mxu0
    %v2100 = vadd.f32 %v2086, %v2099
    %v2101 = vpop.f32.mrf.mxu0
    %v2102 = vadd.f32 %v2088, %v2101
    %2103 = vdwg.mxu0
    %2104 = vmatpush.bf16.msra.mxu0 %v1765
    %2105 = vmatpush.bf16.msra.mxu0 %v1761
    %2106 = vmatpush.bf16.msra.mxu0 %v1757
    %2107 = vmatpush.bf16.msra.mxu0 %v1753
    %2108 = vmatpush.bf16.msra.mxu0 %v1749
    %2109 = vmatpush.bf16.msra.mxu0 %v1745
    %2110 = vmatpush.bf16.msra.mxu0 %v1741
    %2111 = vmatpush.bf16.msra.mxu0 %v1737
    %2112 = vmatmul.bf16.gmra.mxu0 %v1125
    %v2113 = vpop.f32.mrf.mxu0
    %v2114 = vadd.f32 %v2100, %v2113
    %v2115 = vpop.f32.mrf.mxu0
    %v2116 = vadd.f32 %v2102, %v2115
    %2117 = vdwg.mxu0
    %v2118 = vrcp.pop %v1116
    %v2119 = vrcp.pop %v1121
    %v2120 = vmul.f32 %v1946, %v2118
    %v2121 = vmul.f32 %v2002, %v2118
    %v2122 = vmul.f32 %v2058, %v2118
    %v2123 = vmul.f32 %v2114, %v2118
    %v2124 = vmul.f32 %v1948, %v2119
    %v2125 = vmul.f32 %v2004, %v2119
    %v2126 = vmul.f32 %v2060, %v2119
    %v2127 = vmul.f32 %v2116, %v2119
    %2128 = vst [vmem:[#allocation8] sm:$0xff] %v2120
    %2129 = vst [vmem:[#allocation8 + $0x8] sm:$0xff] %v2121
    %2130 = vst [vmem:[#allocation8 + $0x10] sm:$0xff] %v2122
    %2131 = vst [vmem:[#allocation8 + $0x18] sm:$0xff] %v2123
    %2132 = vst [vmem:[#allocation8 + $0x20] sm:$0xff] %v2124
    %2133 = vst [vmem:[#allocation8 + $0x28] sm:$0xff] %v2125
    %2134 = vst [vmem:[#allocation8 + $0x30] sm:$0xff] %v2126
    %2135 = vst [vmem:[#allocation8 + $0x38] sm:$0xff] %v2127
    // Predicated region
    $region26: #{tpu_custom_call.1} parent=1 // pred_check
      _
    $region27: #{tpu_custom_call.1} parent=1 // pred_check_branch
      %2137 = sbr.rel (0) target = $region29
    $region28: #{tpu_custom_call.1} parent=1 // pred_region
      %2139 = vsyncadd [#allocation4], 0
      %s2140 = sshll.u32 [#allocation8], 4
      %s2141 = int_to_ptr.vmem [resolvable:$true] %s2140
      %s2142 = sshll.u32 %s3, 4
      %s2143 = int_to_ptr.hbm [resolvable:$true] %s2142
      %2148 = dma.vmem_to_hbm [thread:$0]  %s2141, 1024, %s2143, [#allocation4], 512, 512, 32
    $region29: #{tpu_custom_call.1} parent=1 // pred_fallthru
      _
    // Predicated region
    $region30: #{tpu_custom_call.1} parent=1 // pred_check
      _
    $region31: #{tpu_custom_call.1} parent=1 // pred_check_branch
      %2150 = sbr.rel (0) target = $region33
    $region32: #{tpu_custom_call.1} parent=1 // pred_region
      %2152 = dma.done [#allocation4], 1024
    $region33: #{tpu_custom_call.1} parent=1 // pred_fallthru
      _
    %2153 = vsyncpa [#allocation3], 1
    %2154 = vsyncpa [#allocation6], 1
    %2155 = vsyncpa [#allocation4], 1

</llo_original>
